<compile_context>
chip_gen: v7x
topology: tpu7x:2x2x1
jax: 0.10.0
libtpu: 0.0.40
codegen_flags: <defaults>
</compile_context>

<pallas_src>
import functools

import jax
import jax.numpy as jnp
from jax.experimental import pallas as pl
from jax.experimental.pallas import tpu as pltpu


def _mlp_kernel(x_ref, w_in_ref, b_in_ref, w_hid_ref, b_hid_ref,
                w_out_ref, b_out_ref, o_ref, *, num_hidden):
    """Fused MLP on one row tile: Linear -> (ReLU -> Linear)*H -> ReLU -> Linear -> Sigmoid."""
    # First linear: [tile_n, Cin] @ [Cin, D] + [1, D]
    h = jnp.dot(x_ref[...], w_in_ref[...],
                preferred_element_type=jnp.float32) + b_in_ref[...]

    # Hidden layers: static unroll (num_hidden is a Python int).
    for l in range(num_hidden):
        h = jnp.maximum(h, 0.0)
        h = jnp.dot(h, w_hid_ref[l],
                    preferred_element_type=jnp.float32) + b_hid_ref[l]

    # Final ReLU -> Linear -> Sigmoid.  Output is lane-dense (128-padded).
    h = jnp.maximum(h, 0.0)
    out = jnp.dot(h, w_out_ref[...],
                  preferred_element_type=jnp.float32) + b_out_ref[...]
    o_ref[...] = jax.nn.sigmoid(out)


def simple_mlp_pallas(x, w_in, b_in, w_hid, b_hid, w_out, b_out, *, tile_n=256):
    """Runs the whole MLP as a single pallas_call tiled over rows of x.

    Weight layout: pre-transposed [in, out] (PyTorch stores [out, in]), so the
    kernel computes y = x @ W + b == PyTorch's y = x @ W_pt.T + b.
    """
    n, c_in = x.shape
    dim_mlp = w_in.shape[1]
    out_channels = w_out.shape[1]
    num_hidden = w_hid.shape[0]

    # --- lane-dense output: pad out_channels up to a multiple of 128 --------
    out_pad = max(128, pl.cdiv(out_channels, 128) * 128)
    if out_pad != out_channels:
        w_out_p = jnp.zeros((dim_mlp, out_pad), w_out.dtype).at[:, :out_channels].set(w_out)
        b_out_p = jnp.zeros((1, out_pad), b_out.dtype).at[:, :out_channels].set(b_out)
    else:
        w_out_p, b_out_p = w_out, b_out

    # --- guard against zero-sized hidden stacks (never read when num_hidden=0)
    if num_hidden == 0:
        w_hid = jnp.zeros((1, dim_mlp, dim_mlp), jnp.float32)
        b_hid = jnp.zeros((1, 1, dim_mlp), jnp.float32)

    # --- adaptive row tiling -------------------------------------------------
    # Sublane-aligned (multiple of 8); never larger than the (padded) row count
    # so small inputs run as a single tile with minimal padding, large inputs
    # stream through a multi-step, double-buffered grid.
    n_sub = pl.cdiv(n, 8) * 8
    tile_n = max(8, min(int(tile_n), n_sub))
    tile_n = pl.cdiv(tile_n, 8) * 8
    n_pad = pl.cdiv(n, tile_n) * tile_n
    if n_pad != n:
        x = jnp.pad(x, ((0, n_pad - n), (0, 0)))
    num_tiles = n_pad // tile_n

    kernel = functools.partial(_mlp_kernel, num_hidden=num_hidden)

    # Weight/bias blocks: full array, constant block index -> VMEM-resident
    # across all grid steps (DMA'd from HBM exactly once).
    def resident(shape):
        return pl.BlockSpec(shape, lambda i, _r=len(shape): (0,) * _r)

    in_specs = [
        pl.BlockSpec((tile_n, c_in), lambda i: (i, 0)),   # streamed activations
        resident(w_in.shape),
        resident(b_in.shape),
        resident(w_hid.shape),
        resident(b_hid.shape),
        resident(w_out_p.shape),
        resident(b_out_p.shape),
    ]
    out_specs = pl.BlockSpec((tile_n, out_pad), lambda i: (i, 0))

    # Advisory cost hint so XLA schedules/overlaps the custom call sensibly.
    flops = 2 * n_pad * (c_in * dim_mlp
                         + num_hidden * dim_mlp * dim_mlp
                         + dim_mlp * out_pad)
    weight_bytes = sum(int(a.size) * a.dtype.itemsize
                       for a in (w_in, b_in, w_hid, b_hid, w_out_p, b_out_p))
    bytes_accessed = (int(x.size) * x.dtype.itemsize
                      + weight_bytes
                      + n_pad * out_pad * 4)
    cost = pl.CostEstimate(flops=int(flops),
                           transcendentals=int(n_pad * out_pad),
                           bytes_accessed=int(bytes_accessed))

    out = pl.pallas_call(
        kernel,
        out_shape=jax.ShapeDtypeStruct((n_pad, out_pad), jnp.float32),
        grid=(num_tiles,),
        in_specs=in_specs,
        out_specs=out_specs,
        compiler_params=pltpu.CompilerParams(
            dimension_semantics=("parallel",)),
        cost_estimate=cost,
    )(x, w_in, b_in, w_hid, b_hid, w_out_p, b_out_p)

    return out[:n, :out_channels]


def init_params(key, in_channels, out_channels, num_mlp_layers, dim_mlp):
    """Deterministic synthetic init mirroring the module's parameter shapes.

    PyTorch Linear weights are (out, in); we store them transposed as (in, out).
    Last-layer bias is zero, matching torch.nn.init.constant_(mlp[-1].bias, 0).
    """
    num_hidden = num_mlp_layers - 2
    keys = jax.random.split(key, 2 * num_mlp_layers + 1)

    def u(k, shape, fan_in):
        bound = 1.0 / jnp.sqrt(fan_in)
        return jax.random.uniform(k, shape, jnp.float32, -bound, bound)

    w_in = u(keys[0], (in_channels, dim_mlp), in_channels)
    b_in = u(keys[1], (1, dim_mlp), in_channels)

    if num_hidden > 0:
        w_hid = jnp.stack(
            [u(keys[2 + 2 * i], (dim_mlp, dim_mlp), dim_mlp) for i in range(num_hidden)])
        b_hid = jnp.stack(
            [u(keys[3 + 2 * i], (1, dim_mlp), dim_mlp) for i in range(num_hidden)])
    else:
        w_hid = jnp.zeros((0, dim_mlp, dim_mlp), jnp.float32)
        b_hid = jnp.zeros((0, 1, dim_mlp), jnp.float32)

    w_out = u(keys[-1], (dim_mlp, out_channels), dim_mlp)
    b_out = jnp.zeros((1, out_channels), jnp.float32)  # constant_(bias, 0)

    return w_in, b_in, w_hid, b_hid, w_out, b_out


def mlp_reference(x, w_in, b_in, w_hid, b_hid, w_out, b_out):
    h = x @ w_in + b_in
    for l in range(w_hid.shape[0]):
        h = jnp.maximum(h, 0.0)
        h = h @ w_hid[l] + b_hid[l]
    h = jnp.maximum(h, 0.0)
    return jax.nn.sigmoid(h @ w_out + b_out)


if __name__ == "__main__":
    # Small shapes consistent with the module: feat_xyz is [N, in_channels],
    # hidden width dim_mlp, num_mlp_layers linears total.  N is deliberately
    # not a multiple of the row tile so padding + a multi-step grid is
    # exercised (300 rows -> two 256-row tiles).
    N = 300
    in_channels = 16
    out_channels = 3
    num_mlp_layers = 4      # -> 1 input linear, 2 hidden linears, 1 output linear
    dim_mlp = 128

    key = jax.random.PRNGKey(0)
    kx, kp = jax.random.split(key)
    x = jax.random.normal(kx, (N, in_channels), jnp.float32)

    params = init_params(kp, in_channels, out_channels, num_mlp_layers, dim_mlp)

    out = simple_mlp_pallas(x, *params)
    out = jax.block_until_ready(out)

    ref = mlp_reference(x, *params)
    assert out.shape == (N, out_channels)
    assert jnp.allclose(out, ref, atol=1e-5, rtol=1e-5)

    print("KERNEL_OK")
</pallas_src>

<mosaic_0001>
module attributes {stable_mosaic.version = 11 : i64} {
  func.func @_mlp_kernel(%arg0: i32, %arg1: memref<256x16xf32, #tpu.memory_space<vmem>>, %arg2: memref<16x128xf32, #tpu.memory_space<vmem>>, %arg3: memref<1x128xf32, #tpu.memory_space<vmem>>, %arg4: memref<2x128x128xf32, #tpu.memory_space<vmem>>, %arg5: memref<2x1x128xf32, #tpu.memory_space<vmem>>, %arg6: memref<128x128xf32, #tpu.memory_space<vmem>>, %arg7: memref<1x128xf32, #tpu.memory_space<vmem>>, %arg8: memref<256x128xf32, #tpu.memory_space<vmem>>) attributes {dimension_semantics = [#tpu.dimension_semantics<parallel>], iteration_bounds = array<i64: 2>, scalar_prefetch = 0 : i64, scratch_operands = 0 : i64, tpu.core_type = #tpu.core_type<tc>, window_params = [{transform_indices = @transform_0, window_bounds = array<i64: 256, 16>}, {pipeline_mode = #tpu.pipeline_mode<synchronous>, transform_indices = @transform_1, window_bounds = array<i64: 16, 128>}, {pipeline_mode = #tpu.pipeline_mode<synchronous>, transform_indices = @transform_2, window_bounds = array<i64: 1, 128>}, {pipeline_mode = #tpu.pipeline_mode<synchronous>, transform_indices = @transform_3, window_bounds = array<i64: 2, 128, 128>}, {pipeline_mode = #tpu.pipeline_mode<synchronous>, transform_indices = @transform_4, window_bounds = array<i64: 2, 1, 128>}, {pipeline_mode = #tpu.pipeline_mode<synchronous>, transform_indices = @transform_5, window_bounds = array<i64: 128, 128>}, {pipeline_mode = #tpu.pipeline_mode<synchronous>, transform_indices = @transform_6, window_bounds = array<i64: 1, 128>}, {transform_indices = @transform_7, window_bounds = array<i64: 256, 128>}]} {
    %c0 = arith.constant 0 : index
    %c0_0 = arith.constant 0 : index
    %0 = vector.load %arg1[%c0, %c0_0] : memref<256x16xf32, #tpu.memory_space<vmem>>, vector<256x16xf32>
    %c0_1 = arith.constant 0 : index
    %c0_2 = arith.constant 0 : index
    %1 = vector.load %arg2[%c0_1, %c0_2] : memref<16x128xf32, #tpu.memory_space<vmem>>, vector<16x128xf32>
    %cst = arith.constant dense<0.000000e+00> : vector<256x128xf32>
    %2 = tpu.matmul %0, %1, %cst {dimension_numbers = #tpu.dot_dimension_numbers<[1], [0], [0], [1], [0, 0, 1, 1], [], []>} : vector<256x16xf32>, vector<16x128xf32>, vector<256x128xf32> -> vector<256x128xf32>
    %c0_3 = arith.constant 0 : index
    %c0_4 = arith.constant 0 : index
    %3 = vector.load %arg3[%c0_3, %c0_4] : memref<1x128xf32, #tpu.memory_space<vmem>>, vector<1x128xf32>
    %4 = vector.broadcast %3 : vector<1x128xf32> to vector<256x128xf32>
    %5 = arith.addf %2, %4 : vector<256x128xf32>
    %cst_5 = arith.constant 0.000000e+00 : f32
    %6 = vector.broadcast %cst_5 : f32 to vector<256x128xf32>
    %7 = arith.maximumf %5, %6 : vector<256x128xf32>
    %c0_6 = arith.constant 0 : index
    %c0_7 = arith.constant 0 : index
    %c0_8 = arith.constant 0 : index
    %8 = vector.load %arg4[%c0_6, %c0_7, %c0_8] : memref<2x128x128xf32, #tpu.memory_space<vmem>>, vector<1x128x128xf32>
    %9 = vector.shape_cast %8 : vector<1x128x128xf32> to vector<128x128xf32>
    %cst_9 = arith.constant dense<0.000000e+00> : vector<256x128xf32>
    %10 = tpu.matmul %7, %9, %cst_9 {dimension_numbers = #tpu.dot_dimension_numbers<[1], [0], [0], [1], [0, 0, 1, 1], [], []>} : vector<256x128xf32>, vector<128x128xf32>, vector<256x128xf32> -> vector<256x128xf32>
    %c0_10 = arith.constant 0 : index
    %c0_11 = arith.constant 0 : index
    %c0_12 = arith.constant 0 : index
    %11 = vector.load %arg5[%c0_10, %c0_11, %c0_12] : memref<2x1x128xf32, #tpu.memory_space<vmem>>, vector<1x1x128xf32>
    %12 = vector.shape_cast %11 : vector<1x1x128xf32> to vector<1x128xf32>
    %13 = vector.broadcast %12 : vector<1x128xf32> to vector<256x128xf32>
    %14 = arith.addf %10, %13 : vector<256x128xf32>
    %cst_13 = arith.constant 0.000000e+00 : f32
    %15 = vector.broadcast %cst_13 : f32 to vector<256x128xf32>
    %16 = arith.maximumf %14, %15 : vector<256x128xf32>
    %c1 = arith.constant 1 : index
    %c0_14 = arith.constant 0 : index
    %c0_15 = arith.constant 0 : index
    %17 = vector.load %arg4[%c1, %c0_14, %c0_15] : memref<2x128x128xf32, #tpu.memory_space<vmem>>, vector<1x128x128xf32>
    %18 = vector.shape_cast %17 : vector<1x128x128xf32> to vector<128x128xf32>
    %cst_16 = arith.constant dense<0.000000e+00> : vector<256x128xf32>
    %19 = tpu.matmul %16, %18, %cst_16 {dimension_numbers = #tpu.dot_dimension_numbers<[1], [0], [0], [1], [0, 0, 1, 1], [], []>} : vector<256x128xf32>, vector<128x128xf32>, vector<256x128xf32> -> vector<256x128xf32>
    %c1_17 = arith.constant 1 : index
    %c0_18 = arith.constant 0 : index
    %c0_19 = arith.constant 0 : index
    %20 = vector.load %arg5[%c1_17, %c0_18, %c0_19] : memref<2x1x128xf32, #tpu.memory_space<vmem>>, vector<1x1x128xf32>
    %21 = vector.shape_cast %20 : vector<1x1x128xf32> to vector<1x128xf32>
    %22 = vector.broadcast %21 : vector<1x128xf32> to vector<256x128xf32>
    %23 = arith.addf %19, %22 : vector<256x128xf32>
    %cst_20 = arith.constant 0.000000e+00 : f32
    %24 = vector.broadcast %cst_20 : f32 to vector<256x128xf32>
    %25 = arith.maximumf %23, %24 : vector<256x128xf32>
    %c0_21 = arith.constant 0 : index
    %c0_22 = arith.constant 0 : index
    %26 = vector.load %arg6[%c0_21, %c0_22] : memref<128x128xf32, #tpu.memory_space<vmem>>, vector<128x128xf32>
    %cst_23 = arith.constant dense<0.000000e+00> : vector<256x128xf32>
    %27 = tpu.matmul %25, %26, %cst_23 {dimension_numbers = #tpu.dot_dimension_numbers<[1], [0], [0], [1], [0, 0, 1, 1], [], []>} : vector<256x128xf32>, vector<128x128xf32>, vector<256x128xf32> -> vector<256x128xf32>
    %c0_24 = arith.constant 0 : index
    %c0_25 = arith.constant 0 : index
    %28 = vector.load %arg7[%c0_24, %c0_25] : memref<1x128xf32, #tpu.memory_space<vmem>>, vector<1x128xf32>
    %29 = vector.broadcast %28 : vector<1x128xf32> to vector<256x128xf32>
    %30 = arith.addf %27, %29 : vector<256x128xf32>
    %31 = arith.negf %30 : vector<256x128xf32>
    %32 = math.exp %31 : vector<256x128xf32>
    %cst_26 = arith.constant 1.000000e+00 : f32
    %33 = vector.broadcast %cst_26 : f32 to vector<256x128xf32>
    %34 = arith.addf %33, %32 : vector<256x128xf32>
    %35 = arith.divf %33, %34 : vector<256x128xf32>
    %c0_27 = arith.constant 0 : index
    %c0_28 = arith.constant 0 : index
    %36 = vector.load %arg8[%c0_27, %c0_28] : memref<256x128xf32, #tpu.memory_space<vmem>>, vector<256x128xf32>
    tpu.vector_store %arg8[%c0_27, %c0_28], %35 {strides = array<i32>} : memref<256x128xf32, #tpu.memory_space<vmem>>, vector<256x128xf32>,
    return
  }
  func.func @transform_0(%arg0: i32) -> (i32, i32) {
    %c0_i32 = arith.constant 0 : i32
    %c0_i32_0 = arith.constant 0 : i32
    return %arg0, %c0_i32 : i32, i32
  }
  func.func @transform_1(%arg0: i32) -> (i32, i32) {
    %c0_i32 = arith.constant 0 : i32
    %c0_i32_0 = arith.constant 0 : i32
    %c0_i32_1 = arith.constant 0 : i32
    return %c0_i32, %c0_i32_0 : i32, i32
  }
  func.func @transform_2(%arg0: i32) -> (i32, i32) {
    %c0_i32 = arith.constant 0 : i32
    %c0_i32_0 = arith.constant 0 : i32
    %c0_i32_1 = arith.constant 0 : i32
    return %c0_i32, %c0_i32_0 : i32, i32
  }
  func.func @transform_3(%arg0: i32) -> (i32, i32, i32) {
    %c0_i32 = arith.constant 0 : i32
    %c0_i32_0 = arith.constant 0 : i32
    %c0_i32_1 = arith.constant 0 : i32
    %c0_i32_2 = arith.constant 0 : i32
    return %c0_i32, %c0_i32_0, %c0_i32_1 : i32, i32, i32
  }
  func.func @transform_4(%arg0: i32) -> (i32, i32, i32) {
    %c0_i32 = arith.constant 0 : i32
    %c0_i32_0 = arith.constant 0 : i32
    %c0_i32_1 = arith.constant 0 : i32
    %c0_i32_2 = arith.constant 0 : i32
    return %c0_i32, %c0_i32_0, %c0_i32_1 : i32, i32, i32
  }
  func.func @transform_5(%arg0: i32) -> (i32, i32) {
    %c0_i32 = arith.constant 0 : i32
    %c0_i32_0 = arith.constant 0 : i32
    %c0_i32_1 = arith.constant 0 : i32
    return %c0_i32, %c0_i32_0 : i32, i32
  }
  func.func @transform_6(%arg0: i32) -> (i32, i32) {
    %c0_i32 = arith.constant 0 : i32
    %c0_i32_0 = arith.constant 0 : i32
    %c0_i32_1 = arith.constant 0 : i32
    return %c0_i32, %c0_i32_0 : i32, i32
  }
  func.func @transform_7(%arg0: i32) -> (i32, i32) {
    %c0_i32 = arith.constant 0 : i32
    %c0_i32_0 = arith.constant 0 : i32
    return %arg0, %c0_i32 : i32, i32
  }
}

</mosaic_0001>

<llo_original>
// kernel: tpu_custom_call.1
$region0: #{tpu_custom_call.1}
  #allocation0 [shape = 'u32[]', space=smem, size = 0x4, offset = 0x4, fixed_abs, tag = 'smem constant byte address 0x4 - core index']
  #allocation1 [shape = 'u32[144,128]{1,0:T(1,128)}', space=vmem, size = 0x12000, scoped, tag = 'internal scratch']
  %s0 = inlined_call_operand.vmem [shape: f32[512,16], index: 0, kind: input, shape index: {}]
  %s1 = inlined_call_operand.vmem [shape: f32[16,128], index: 1, kind: input, shape index: {}]
  %s2 = inlined_call_operand.vmem [shape: f32[1,128], index: 2, kind: input, shape index: {}]
  %s3 = inlined_call_operand.vmem [shape: f32[2,128,128], index: 3, kind: input, shape index: {}]
  %s4 = inlined_call_operand.vmem [shape: f32[2,1,128], index: 4, kind: input, shape index: {}]
  %s5 = inlined_call_operand.vmem [shape: f32[128,128], index: 5, kind: input, shape index: {}]
  %s6 = inlined_call_operand.vmem [shape: f32[1,128], index: 6, kind: input, shape index: {}]
  %s7 = inlined_call_operand.hbm [shape: f32[512,128], index: 7, kind: output, shape index: {}]
  %s8 = sld [smem:[#allocation0]]
  $region61: #{tpu_custom_call.1} parent=0
    _
  %s10 = ssub.s32 1, %s8
  %s11 = scalar_select 0, %s10, %s8
  $region1: #{tpu_custom_call.1} parent=0
    #allocation2 [shape = 'u8[262144]{0}', space=vmem, size = 0x40000, scoped, tag = 'output window, operand 0']
    #allocation3 [shape = 's32[2]{0}', space=sflag, size = 0x8, scoped, tag = 'scoped memory for tpu_custom_call.1']
    %12 = vsyncpa [#allocation3], 0
    %s13 = scalar_lea.sflag [#allocation3], 1
    %14 = vsyncpa %s13, 0
    loop: start=0, step=1, limit=4
    $region2: #{tpu_custom_call.1} parent=1 // loop_pre_header
      _
    $region3: #{tpu_custom_call.1} parent=1 // loop_header
      %s16 = sphi 0, %s20
      %p17 = scmp.ge.s32.totalorder %s16, 4
      %s26 = sphi 0, %s28
      %s29 = sphi 0, %s26
      %s30 = sphi 0, %s29
      %s46 = sphi 0, %s30
      %s50 = sphi 0, %s50
      %s52 = sphi 0, %s50
      %s53 = sphi 0, %s52
      %s67 = sphi 0, %s53
      %s71 = sphi 0, %s71
      %s73 = sphi 0, %s71
      %s74 = sphi 0, %s73
      %s88 = sphi 0, %s74
      %s92 = sphi 0, %s92
      %s94 = sphi 0, %s92
      %s95 = sphi 0, %s94
      %s109 = sphi 0, %s95
      %s113 = sphi 0, %s113
      %s115 = sphi 0, %s113
      %s116 = sphi 0, %s115
      %s130 = sphi 0, %s116
      %s134 = sphi 0, %s134
      %s136 = sphi 0, %s134
      %s137 = sphi 0, %s136
      %s151 = sphi 0, %s137
      %s155 = sphi 0, %s155
      %s157 = sphi 0, %s155
      %s158 = sphi 0, %s157
      %s172 = sphi 0, %s158
      %s178 = sphi 0, %s180
      %s181 = sphi 0, %s178
      %s182 = sphi 0, %s181
      %s198 = sphi 0, %s182
    $region4: #{tpu_custom_call.1} parent=1 // loop_header_branch
      %19 = sbr.rel (%p17) target = $region8
    $region5: #{tpu_custom_call.1} parent=1 // loop_body
      %s21 = ssub.s32 %s16, 1
      %s22 = ssub.s32 %s16, 2
      %s23 = sadd.s32 %s16, 1
      %s24 = ssub.s32 %s16, %s23
      %p25 = scmp.eq.s32.totalorder %s24, 0
      %s27 = sadd.s32 %s26, 1
      %s28 = scalar_select %p25, %s26, %s27
      %p31 = pneg %p25
      %p32 = scmp.eq.s32.totalorder %s16, 1
      %p33 = por %p31, %p32
      %p34 = scmp.ne.s32.totalorder %s26, %s29
      %p35 = scmp.eq.s32.totalorder %s16, 0
      %p36 = por %p34, %p35
      %p37 = scmp.ne.s32.totalorder %s26, %s29
      %p38 = scmp.eq.s32.totalorder %s21, 1
      %p39 = por %p37, %p38
      %p40 = scmp.ne.s32.totalorder %s29, %s30
      %p41 = scmp.eq.s32.totalorder %s21, 0
      %p42 = por %p40, %p41
      %p43 = scmp.ne.s32.totalorder %s29, %s30
      %p44 = scmp.eq.s32.totalorder %s22, 1
      %p45 = por %p43, %p44
      %p47 = scmp.ne.s32.totalorder %s30, %s46
      %p48 = scmp.eq.s32.totalorder %s22, 0
      %p49 = por %p47, %p48
      %s51 = sadd.s32 %s50, 1
      %p54 = scmp.eq.s32.totalorder %s16, 1
      %p55 = scmp.ne.s32.totalorder %s50, %s52
      %p56 = scmp.eq.s32.totalorder %s16, 0
      %p57 = por %p55, %p56
      %p58 = scmp.ne.s32.totalorder %s50, %s52
      %p59 = scmp.eq.s32.totalorder %s21, 1
      %p60 = por %p58, %p59
      %p61 = scmp.ne.s32.totalorder %s52, %s53
      %p62 = scmp.eq.s32.totalorder %s21, 0
      %p63 = por %p61, %p62
      %p64 = scmp.ne.s32.totalorder %s52, %s53
      %p65 = scmp.eq.s32.totalorder %s22, 1
      %p66 = por %p64, %p65
      %p68 = scmp.ne.s32.totalorder %s53, %s67
      %p69 = scmp.eq.s32.totalorder %s22, 0
      %p70 = por %p68, %p69
      %s72 = sadd.s32 %s71, 1
      %p75 = scmp.eq.s32.totalorder %s16, 1
      %p76 = scmp.ne.s32.totalorder %s71, %s73
      %p77 = scmp.eq.s32.totalorder %s16, 0
      %p78 = por %p76, %p77
      %p79 = scmp.ne.s32.totalorder %s71, %s73
      %p80 = scmp.eq.s32.totalorder %s21, 1
      %p81 = por %p79, %p80
      %p82 = scmp.ne.s32.totalorder %s73, %s74
      %p83 = scmp.eq.s32.totalorder %s21, 0
      %p84 = por %p82, %p83
      %p85 = scmp.ne.s32.totalorder %s73, %s74
      %p86 = scmp.eq.s32.totalorder %s22, 1
      %p87 = por %p85, %p86
      %p89 = scmp.ne.s32.totalorder %s74, %s88
      %p90 = scmp.eq.s32.totalorder %s22, 0
      %p91 = por %p89, %p90
      %s93 = sadd.s32 %s92, 1
      %p96 = scmp.eq.s32.totalorder %s16, 1
      %p97 = scmp.ne.s32.totalorder %s92, %s94
      %p98 = scmp.eq.s32.totalorder %s16, 0
      %p99 = por %p97, %p98
      %p100 = scmp.ne.s32.totalorder %s92, %s94
      %p101 = scmp.eq.s32.totalorder %s21, 1
      %p102 = por %p100, %p101
      %p103 = scmp.ne.s32.totalorder %s94, %s95
      %p104 = scmp.eq.s32.totalorder %s21, 0
      %p105 = por %p103, %p104
      %p106 = scmp.ne.s32.totalorder %s94, %s95
      %p107 = scmp.eq.s32.totalorder %s22, 1
      %p108 = por %p106, %p107
      %p110 = scmp.ne.s32.totalorder %s95, %s109
      %p111 = scmp.eq.s32.totalorder %s22, 0
      %p112 = por %p110, %p111
      %s114 = sadd.s32 %s113, 1
      %p117 = scmp.eq.s32.totalorder %s16, 1
      %p118 = scmp.ne.s32.totalorder %s113, %s115
      %p119 = scmp.eq.s32.totalorder %s16, 0
      %p120 = por %p118, %p119
      %p121 = scmp.ne.s32.totalorder %s113, %s115
      %p122 = scmp.eq.s32.totalorder %s21, 1
      %p123 = por %p121, %p122
      %p124 = scmp.ne.s32.totalorder %s115, %s116
      %p125 = scmp.eq.s32.totalorder %s21, 0
      %p126 = por %p124, %p125
      %p127 = scmp.ne.s32.totalorder %s115, %s116
      %p128 = scmp.eq.s32.totalorder %s22, 1
      %p129 = por %p127, %p128
      %p131 = scmp.ne.s32.totalorder %s116, %s130
      %p132 = scmp.eq.s32.totalorder %s22, 0
      %p133 = por %p131, %p132
      %s135 = sadd.s32 %s134, 1
      %p138 = scmp.eq.s32.totalorder %s16, 1
      %p139 = scmp.ne.s32.totalorder %s134, %s136
      %p140 = scmp.eq.s32.totalorder %s16, 0
      %p141 = por %p139, %p140
      %p142 = scmp.ne.s32.totalorder %s134, %s136
      %p143 = scmp.eq.s32.totalorder %s21, 1
      %p144 = por %p142, %p143
      %p145 = scmp.ne.s32.totalorder %s136, %s137
      %p146 = scmp.eq.s32.totalorder %s21, 0
      %p147 = por %p145, %p146
      %p148 = scmp.ne.s32.totalorder %s136, %s137
      %p149 = scmp.eq.s32.totalorder %s22, 1
      %p150 = por %p148, %p149
      %p152 = scmp.ne.s32.totalorder %s137, %s151
      %p153 = scmp.eq.s32.totalorder %s22, 0
      %p154 = por %p152, %p153
      %s156 = sadd.s32 %s155, 1
      %p159 = scmp.eq.s32.totalorder %s16, 1
      %p160 = scmp.ne.s32.totalorder %s155, %s157
      %p161 = scmp.eq.s32.totalorder %s16, 0
      %p162 = por %p160, %p161
      %p163 = scmp.ne.s32.totalorder %s155, %s157
      %p164 = scmp.eq.s32.totalorder %s21, 1
      %p165 = por %p163, %p164
      %p166 = scmp.ne.s32.totalorder %s157, %s158
      %p167 = scmp.eq.s32.totalorder %s21, 0
      %p168 = por %p166, %p167
      %p169 = scmp.ne.s32.totalorder %s157, %s158
      %p170 = scmp.eq.s32.totalorder %s22, 1
      %p171 = por %p169, %p170
      %p173 = scmp.ne.s32.totalorder %s158, %s172
      %p174 = scmp.eq.s32.totalorder %s22, 0
      %p175 = por %p173, %p174
      %s176 = ssub.s32 %s16, %s23
      %p177 = scmp.eq.s32.totalorder %s176, 0
      %s179 = sadd.s32 %s178, 1
      %s180 = scalar_select %p177, %s178, %s179
      %p183 = pneg %p177
      %p184 = scmp.eq.s32.totalorder %s16, 1
      %p185 = por %p183, %p184
      %p186 = scmp.ne.s32.totalorder %s178, %s181
      %p187 = scmp.eq.s32.totalorder %s16, 0
      %p188 = por %p186, %p187
      %p189 = scmp.ne.s32.totalorder %s178, %s181
      %p190 = scmp.eq.s32.totalorder %s21, 1
      %p191 = por %p189, %p190
      %p192 = scmp.ne.s32.totalorder %s181, %s182
      %p193 = scmp.eq.s32.totalorder %s21, 0
      %p194 = por %p192, %p193
      %p195 = scmp.ne.s32.totalorder %s181, %s182
      %p196 = scmp.eq.s32.totalorder %s22, 1
      %p197 = por %p195, %p196
      %p199 = scmp.ne.s32.totalorder %s182, %s198
      %p200 = scmp.eq.s32.totalorder %s22, 0
      %p201 = por %p199, %p200
      %p202 = scmp.le.s32.totalorder 1, %s16
      %p203 = scmp.lt.s32.totalorder %s16, 3
      %p204 = pnand %p202, %p203
      %p205 = pneg %p204
      // Predicated region
      $region9: #{tpu_custom_call.1} parent=5 // pred_check
        _
      $region10: #{tpu_custom_call.1} parent=5 // pred_check_branch
        %207 = sbr.rel (%p204) target = $region12
      $region11: #{tpu_custom_call.1} parent=5 // pred_region
        %s208 = ssub.s32 %s16, 1
        // Predicated region
        $region13: #{tpu_custom_call.1} parent=11 // pred_check
          %p209 = pneg %p63
        $region14: #{tpu_custom_call.1} parent=11 // pred_check_branch
          %211 = sbr.rel (%p209) target = $region16
        $region15: #{tpu_custom_call.1} parent=11 // pred_region
          _
        $region16: #{tpu_custom_call.1} parent=11 // pred_fallthru
          _
        // Predicated region
        $region17: #{tpu_custom_call.1} parent=11 // pred_check
          %p212 = pneg %p84
        $region18: #{tpu_custom_call.1} parent=11 // pred_check_branch
          %214 = sbr.rel (%p212) target = $region20
        $region19: #{tpu_custom_call.1} parent=11 // pred_region
          _
        $region20: #{tpu_custom_call.1} parent=11 // pred_fallthru
          _
        // Predicated region
        $region21: #{tpu_custom_call.1} parent=11 // pred_check
          %p215 = pneg %p105
        $region22: #{tpu_custom_call.1} parent=11 // pred_check_branch
          %217 = sbr.rel (%p215) target = $region24
        $region23: #{tpu_custom_call.1} parent=11 // pred_region
          _
        $region24: #{tpu_custom_call.1} parent=11 // pred_fallthru
          _
        // Predicated region
        $region25: #{tpu_custom_call.1} parent=11 // pred_check
          %p218 = pneg %p126
        $region26: #{tpu_custom_call.1} parent=11 // pred_check_branch
          %220 = sbr.rel (%p218) target = $region28
        $region27: #{tpu_custom_call.1} parent=11 // pred_region
          _
        $region28: #{tpu_custom_call.1} parent=11 // pred_fallthru
          _
        // Predicated region
        $region29: #{tpu_custom_call.1} parent=11 // pred_check
          %p221 = pneg %p147
        $region30: #{tpu_custom_call.1} parent=11 // pred_check_branch
          %223 = sbr.rel (%p221) target = $region32
        $region31: #{tpu_custom_call.1} parent=11 // pred_region
          _
        $region32: #{tpu_custom_call.1} parent=11 // pred_fallthru
          _
        // Predicated region
        $region33: #{tpu_custom_call.1} parent=11 // pred_check
          %p224 = pneg %p168
        $region34: #{tpu_custom_call.1} parent=11 // pred_check_branch
          %226 = sbr.rel (%p224) target = $region36
        $region35: #{tpu_custom_call.1} parent=11 // pred_region
          _
        $region36: #{tpu_custom_call.1} parent=11 // pred_fallthru
          _
      $region12: #{tpu_custom_call.1} parent=5 // pred_fallthru
        _
      %p227 = scmp.lt.s32.totalorder %s16, 2
      // Predicated region
      $region37: #{tpu_custom_call.1} parent=5 // pred_check
        %p228 = pneg %p227
      $region38: #{tpu_custom_call.1} parent=5 // pred_check_branch
        %230 = sbr.rel (%p228) target = $region40
      $region39: #{tpu_custom_call.1} parent=5 // pred_region
        // Predicated region
        $region41: #{tpu_custom_call.1} parent=39 // pred_check
          %p231 = pneg %p36
        $region42: #{tpu_custom_call.1} parent=39 // pred_check_branch
          %233 = sbr.rel (%p231) target = $region44
        $region43: #{tpu_custom_call.1} parent=39 // pred_region
          %s234 = smul.u32 32, %s16
          %p235 = scmp.lt.s32.totalorder %s234, 63
          %s236 = scalar_select %p235, %s234, 63
          %s237 = smul.addr %s236, 8
          %s238 = scalar_lea.vmem %s0, %s237
          %s239 = smul.u32 32, %s16
        $region44: #{tpu_custom_call.1} parent=39 // pred_fallthru
          _
      $region40: #{tpu_custom_call.1} parent=5 // pred_fallthru
        _
      %p240 = scmp.le.s32.totalorder 1, %s16
      %p241 = scmp.lt.s32.totalorder %s16, 3
      %p242 = pnand %p240, %p241
      %p243 = pneg %p242
      // Predicated region
      $region45: #{tpu_custom_call.1} parent=5 // pred_check
        _
      $region46: #{tpu_custom_call.1} parent=5 // pred_check_branch
        %245 = sbr.rel (%p242) target = $region48
      $region47: #{tpu_custom_call.1} parent=5 // pred_region
        %s246 = ssub.s32 %s16, 1
        %s247 = smul.u32 32, %s21
        %p248 = scmp.lt.s32.totalorder %s247, 63
        %s249 = scalar_select %p248, %s247, 63
        %s250 = smul.addr %s249, 8
        %s251 = scalar_lea.vmem %s0, %s250
        %p252 = pneg %p42
        %p253 = pneg %p39
        %p254 = pneg %p63
        %p255 = pneg %p60
        %p256 = pneg %p84
        %p257 = pneg %p81
        %p258 = pneg %p105
        %p259 = pneg %p102
        %p260 = pneg %p126
        %p261 = pneg %p123
        %p262 = pneg %p147
        %p263 = pneg %p144
        %p264 = pneg %p168
        %p265 = pneg %p165
        %p266 = pneg %p194
        %p267 = pneg %p191
        %s268 = sand.u32 %s181, 1
        %s269 = scalar_lea.sflag [#allocation3], %s268
        %s270 = sand.u32 %s181, 1
        %s271 = smul.addr %s270, 256
        %s272 = scalar_lea.vmem [#allocation2], %s271
        %s273 = smul.u32 32, %s21
        %p274 = scmp.lt.s32.totalorder %s273, 63
        %s275 = scalar_select %p274, %s273, 63
        %s276 = smul.addr %s275, 8
        %s277 = scalar_lea.vmem %s0, %s276
        %s278 = smul.u32 32, %s21
        %s279 = smul.u32 32, %s21
        %v280 = vld [vmem:[%s277] sm:$0xff]
        %v281 = vld [vmem:[%s277 + $0x8] sm:$0xff]
        %v282 = vld [vmem:[%s277 + $0x10] sm:$0xff]
        %v283 = vld [vmem:[%s277 + $0x18] sm:$0xff]
        %v284 = vld [vmem:[%s277 + $0x20] sm:$0xff]
        %v285 = vld [vmem:[%s277 + $0x28] sm:$0xff]
        %v286 = vld [vmem:[%s277 + $0x30] sm:$0xff]
        %v287 = vld [vmem:[%s277 + $0x38] sm:$0xff]
        %v288 = vld [vmem:[%s277 + $0x40] sm:$0xff]
        %v289 = vld [vmem:[%s277 + $0x48] sm:$0xff]
        %v290 = vld [vmem:[%s277 + $0x50] sm:$0xff]
        %v291 = vld [vmem:[%s277 + $0x58] sm:$0xff]
        %v292 = vld [vmem:[%s277 + $0x60] sm:$0xff]
        %v293 = vld [vmem:[%s277 + $0x68] sm:$0xff]
        %v294 = vld [vmem:[%s277 + $0x70] sm:$0xff]
        %v295 = vld [vmem:[%s277 + $0x78] sm:$0xff]
        %v296 = vld [vmem:[%s277 + $0x80] sm:$0xff]
        %v297 = vld [vmem:[%s277 + $0x88] sm:$0xff]
        %v298 = vld [vmem:[%s277 + $0x90] sm:$0xff]
        %v299 = vld [vmem:[%s277 + $0x98] sm:$0xff]
        %v300 = vld [vmem:[%s277 + $0xa0] sm:$0xff]
        %v301 = vld [vmem:[%s277 + $0xa8] sm:$0xff]
        %v302 = vld [vmem:[%s277 + $0xb0] sm:$0xff]
        %v303 = vld [vmem:[%s277 + $0xb8] sm:$0xff]
        %v304 = vld [vmem:[%s277 + $0xc0] sm:$0xff]
        %v305 = vld [vmem:[%s277 + $0xc8] sm:$0xff]
        %v306 = vld [vmem:[%s277 + $0xd0] sm:$0xff]
        %v307 = vld [vmem:[%s277 + $0xd8] sm:$0xff]
        %v308 = vld [vmem:[%s277 + $0xe0] sm:$0xff]
        %v309 = vld [vmem:[%s277 + $0xe8] sm:$0xff]
        %v310 = vld [vmem:[%s277 + $0xf0] sm:$0xff]
        %v311 = vld [vmem:[%s277 + $0xf8] sm:$0xff]
        %v312 = vld [vmem:[%s1] sm:$0xff]
        %v313 = vld [vmem:[%s1 + $0x8] sm:$0xff]
        %v314 = vld [vmem:[%s2] sm:$0x1]
        %v316 = vlaneseq
        %v317 = vshrl.u32 %v316, 7
        %v318 = vsub.s32 0, %v317
        %v319 = vrot.slane %v314, %v318
        %vm321 = vcmask 130048
        %v323 = vsel %vm321, %v280, 0
        %v326 = vsel %vm321, %v281, 0
        %v329 = vsel %vm321, %v282, 0
        %v332 = vsel %vm321, %v283, 0
        %v335 = vsel %vm321, %v284, 0
        %v338 = vsel %vm321, %v285, 0
        %v341 = vsel %vm321, %v286, 0
        %v344 = vsel %vm321, %v287, 0
        %v347 = vsel %vm321, %v288, 0
        %v350 = vsel %vm321, %v289, 0
        %v353 = vsel %vm321, %v290, 0
        %v356 = vsel %vm321, %v291, 0
        %v359 = vsel %vm321, %v292, 0
        %v362 = vsel %vm321, %v293, 0
        %v365 = vsel %vm321, %v294, 0
        %v368 = vsel %vm321, %v295, 0
        %v371 = vsel %vm321, %v296, 0
        %v374 = vsel %vm321, %v297, 0
        %v377 = vsel %vm321, %v298, 0
        %v380 = vsel %vm321, %v299, 0
        %v383 = vsel %vm321, %v300, 0
        %v386 = vsel %vm321, %v301, 0
        %v389 = vsel %vm321, %v302, 0
        %v392 = vsel %vm321, %v303, 0
        %v395 = vsel %vm321, %v304, 0
        %v398 = vsel %vm321, %v305, 0
        %v401 = vsel %vm321, %v306, 0
        %v404 = vsel %vm321, %v307, 0
        %v407 = vsel %vm321, %v308, 0
        %v410 = vsel %vm321, %v309, 0
        %v413 = vsel %vm321, %v310, 0
        %v416 = vsel %vm321, %v311, 0
        %418 = vmatprep.subr.mxu0 0.0
        %419 = vmatpush1.msra.mxu0 %v312
        %420 = vmatprep.subr.mxu0 0.0
        %421 = vmatpush1.msra.mxu0 %v313
        %422 = vmatprep.subr.mxu0 0.0
        %423 = vmatpush1.msra.mxu0 0.0
        %424 = vmatprep.subr.mxu0 0.0
        %425 = vmatpush1.msra.mxu0 0.0
        %426 = vmatprep.subr.mxu0 0.0
        %427 = vmatpush1.msra.mxu0 0.0
        %428 = vmatprep.subr.mxu0 0.0
        %429 = vmatpush1.msra.mxu0 0.0
        %430 = vmatprep.subr.mxu0 0.0
        %431 = vmatpush1.msra.mxu0 0.0
        %432 = vmatprep.subr.mxu0 0.0
        %433 = vmatpush1.msra.mxu0 0.0
        %434 = vmatprep.subr.mxu0 0.0
        %435 = vmatpush1.msra.mxu0 0.0
        %436 = vmatprep.subr.mxu0 0.0
        %437 = vmatpush1.msra.mxu0 0.0
        %438 = vmatprep.subr.mxu0 0.0
        %439 = vmatpush1.msra.mxu0 0.0
        %440 = vmatprep.subr.mxu0 0.0
        %441 = vmatpush1.msra.mxu0 0.0
        %442 = vmatprep.subr.mxu0 0.0
        %443 = vmatpush1.msra.mxu0 0.0
        %444 = vmatprep.subr.mxu0 0.0
        %445 = vmatpush1.msra.mxu0 0.0
        %446 = vmatprep.subr.mxu0 0.0
        %447 = vmatpush1.msra.mxu0 0.0
        %448 = vmatprep.subr.mxu0 0.0
        %449 = vmatpush1.msra.mxu0 0.0
        %450 = vmatprep.subr.mxu0 0.0
        %451 = vmatpush1.msra.mxu0 0.0
        %452 = vmatprep.subr.mxu0 0.0
        %453 = vmatpush1.msra.mxu0 0.0
        %454 = vmatprep.subr.mxu0 0.0
        %455 = vmatpush1.msra.mxu0 0.0
        %456 = vmatprep.subr.mxu0 0.0
        %457 = vmatpush1.msra.mxu0 0.0
        %458 = vmatprep.subr.mxu0 0.0
        %459 = vmatpush1.msra.mxu0 0.0
        %460 = vmatprep.subr.mxu0 0.0
        %461 = vmatpush1.msra.mxu0 0.0
        %462 = vmatprep.subr.mxu0 0.0
        %463 = vmatpush1.msra.mxu0 0.0
        %464 = vmatprep.subr.mxu0 0.0
        %465 = vmatpush1.msra.mxu0 0.0
        %466 = vmatprep.subr.mxu0 0.0
        %467 = vmatpush1.msra.mxu0 0.0
        %468 = vmatprep.subr.mxu0 0.0
        %469 = vmatpush1.msra.mxu0 0.0
        %470 = vmatprep.subr.mxu0 0.0
        %471 = vmatpush1.msra.mxu0 0.0
        %472 = vmatprep.subr.mxu0 0.0
        %473 = vmatpush1.msra.mxu0 0.0
        %474 = vmatprep.subr.mxu0 0.0
        %475 = vmatpush1.msra.mxu0 0.0
        %476 = vmatprep.subr.mxu0 0.0
        %477 = vmatpush1.msra.mxu0 0.0
        %478 = vmatprep.subr.mxu0 0.0
        %479 = vmatpush1.msra.mxu0 0.0
        %480 = vmatprep.subr.mxu0 0.0
        %481 = vmatpush1.msra.mxu0 0.0
        %482 = vmatprep.mubr.f32.mxu0 0.0
        %483 = vmatmul.mubr.f32.gmra.mrb[0].mxu0 %v323
        %v484 = vpop.f32.mrb[0].mxu0
        %v485 = vadd.f32 %v319, %v484
        %v486 = vpop.f32.mrb[0].mxu0
        %487 = vmatprep.mubr.f32.mxu0 0.0
        %488 = vmatmul.mubr.f32.gmra.mrb[0].mxu0 %v326
        %v489 = vpop.f32.mrb[0].mxu0
        %v490 = vadd.f32 %v319, %v489
        %v491 = vpop.f32.mrb[0].mxu0
        %492 = vmatprep.mubr.f32.mxu0 0.0
        %493 = vmatmul.mubr.f32.gmra.mrb[0].mxu0 %v329
        %v494 = vpop.f32.mrb[0].mxu0
        %v495 = vadd.f32 %v319, %v494
        %v496 = vpop.f32.mrb[0].mxu0
        %497 = vmatprep.mubr.f32.mxu0 0.0
        %498 = vmatmul.mubr.f32.gmra.mrb[0].mxu0 %v332
        %v499 = vpop.f32.mrb[0].mxu0
        %v500 = vadd.f32 %v319, %v499
        %v501 = vpop.f32.mrb[0].mxu0
        %502 = vmatprep.mubr.f32.mxu0 0.0
        %503 = vmatmul.mubr.f32.gmra.mrb[0].mxu0 %v335
        %v504 = vpop.f32.mrb[0].mxu0
        %v505 = vadd.f32 %v319, %v504
        %v506 = vpop.f32.mrb[0].mxu0
        %507 = vmatprep.mubr.f32.mxu0 0.0
        %508 = vmatmul.mubr.f32.gmra.mrb[0].mxu0 %v338
        %v509 = vpop.f32.mrb[0].mxu0
        %v510 = vadd.f32 %v319, %v509
        %v511 = vpop.f32.mrb[0].mxu0
        %512 = vmatprep.mubr.f32.mxu0 0.0
        %513 = vmatmul.mubr.f32.gmra.mrb[0].mxu0 %v341
        %v514 = vpop.f32.mrb[0].mxu0
        %v515 = vadd.f32 %v319, %v514
        %v516 = vpop.f32.mrb[0].mxu0
        %517 = vmatprep.mubr.f32.mxu0 0.0
        %518 = vmatmul.mubr.f32.gmra.mrb[0].mxu0 %v344
        %v519 = vpop.f32.mrb[0].mxu0
        %v520 = vadd.f32 %v319, %v519
        %v521 = vpop.f32.mrb[0].mxu0
        %522 = vmatprep.mubr.f32.mxu0 0.0
        %523 = vmatmul.mubr.f32.gmra.mrb[0].mxu0 %v347
        %v524 = vpop.f32.mrb[0].mxu0
        %v525 = vadd.f32 %v319, %v524
        %v526 = vpop.f32.mrb[0].mxu0
        %527 = vmatprep.mubr.f32.mxu0 0.0
        %528 = vmatmul.mubr.f32.gmra.mrb[0].mxu0 %v350
        %v529 = vpop.f32.mrb[0].mxu0
        %v530 = vadd.f32 %v319, %v529
        %v531 = vpop.f32.mrb[0].mxu0
        %532 = vmatprep.mubr.f32.mxu0 0.0
        %533 = vmatmul.mubr.f32.gmra.mrb[0].mxu0 %v353
        %v534 = vpop.f32.mrb[0].mxu0
        %v535 = vadd.f32 %v319, %v534
        %v536 = vpop.f32.mrb[0].mxu0
        %537 = vmatprep.mubr.f32.mxu0 0.0
        %538 = vmatmul.mubr.f32.gmra.mrb[0].mxu0 %v356
        %v539 = vpop.f32.mrb[0].mxu0
        %v540 = vadd.f32 %v319, %v539
        %v541 = vpop.f32.mrb[0].mxu0
        %542 = vmatprep.mubr.f32.mxu0 0.0
        %543 = vmatmul.mubr.f32.gmra.mrb[0].mxu0 %v359
        %v544 = vpop.f32.mrb[0].mxu0
        %v545 = vadd.f32 %v319, %v544
        %v546 = vpop.f32.mrb[0].mxu0
        %547 = vmatprep.mubr.f32.mxu0 0.0
        %548 = vmatmul.mubr.f32.gmra.mrb[0].mxu0 %v362
        %v549 = vpop.f32.mrb[0].mxu0
        %v550 = vadd.f32 %v319, %v549
        %v551 = vpop.f32.mrb[0].mxu0
        %552 = vmatprep.mubr.f32.mxu0 0.0
        %553 = vmatmul.mubr.f32.gmra.mrb[0].mxu0 %v365
        %v554 = vpop.f32.mrb[0].mxu0
        %v555 = vadd.f32 %v319, %v554
        %v556 = vpop.f32.mrb[0].mxu0
        %557 = vmatprep.mubr.f32.mxu0 0.0
        %558 = vmatmul.mubr.f32.gmra.mrb[0].mxu0 %v368
        %v559 = vpop.f32.mrb[0].mxu0
        %v560 = vadd.f32 %v319, %v559
        %v561 = vpop.f32.mrb[0].mxu0
        %562 = vmatprep.mubr.f32.mxu0 0.0
        %563 = vmatmul.mubr.f32.gmra.mrb[0].mxu0 %v371
        %v564 = vpop.f32.mrb[0].mxu0
        %v565 = vadd.f32 %v319, %v564
        %v566 = vpop.f32.mrb[0].mxu0
        %567 = vmatprep.mubr.f32.mxu0 0.0
        %568 = vmatmul.mubr.f32.gmra.mrb[0].mxu0 %v374
        %v569 = vpop.f32.mrb[0].mxu0
        %v570 = vadd.f32 %v319, %v569
        %v571 = vpop.f32.mrb[0].mxu0
        %572 = vmatprep.mubr.f32.mxu0 0.0
        %573 = vmatmul.mubr.f32.gmra.mrb[0].mxu0 %v377
        %v574 = vpop.f32.mrb[0].mxu0
        %v575 = vadd.f32 %v319, %v574
        %v576 = vpop.f32.mrb[0].mxu0
        %577 = vmatprep.mubr.f32.mxu0 0.0
        %578 = vmatmul.mubr.f32.gmra.mrb[0].mxu0 %v380
        %v579 = vpop.f32.mrb[0].mxu0
        %v580 = vadd.f32 %v319, %v579
        %v581 = vpop.f32.mrb[0].mxu0
        %582 = vmatprep.mubr.f32.mxu0 0.0
        %583 = vmatmul.mubr.f32.gmra.mrb[0].mxu0 %v383
        %v584 = vpop.f32.mrb[0].mxu0
        %v585 = vadd.f32 %v319, %v584
        %v586 = vpop.f32.mrb[0].mxu0
        %587 = vmatprep.mubr.f32.mxu0 0.0
        %588 = vmatmul.mubr.f32.gmra.mrb[0].mxu0 %v386
        %v589 = vpop.f32.mrb[0].mxu0
        %v590 = vadd.f32 %v319, %v589
        %v591 = vpop.f32.mrb[0].mxu0
        %592 = vmatprep.mubr.f32.mxu0 0.0
        %593 = vmatmul.mubr.f32.gmra.mrb[0].mxu0 %v389
        %v594 = vpop.f32.mrb[0].mxu0
        %v595 = vadd.f32 %v319, %v594
        %v596 = vpop.f32.mrb[0].mxu0
        %597 = vmatprep.mubr.f32.mxu0 0.0
        %598 = vmatmul.mubr.f32.gmra.mrb[0].mxu0 %v392
        %v599 = vpop.f32.mrb[0].mxu0
        %v600 = vadd.f32 %v319, %v599
        %v601 = vpop.f32.mrb[0].mxu0
        %602 = vmatprep.mubr.f32.mxu0 0.0
        %603 = vmatmul.mubr.f32.gmra.mrb[0].mxu0 %v395
        %v604 = vpop.f32.mrb[0].mxu0
        %v605 = vadd.f32 %v319, %v604
        %v606 = vpop.f32.mrb[0].mxu0
        %607 = vmatprep.mubr.f32.mxu0 0.0
        %608 = vmatmul.mubr.f32.gmra.mrb[0].mxu0 %v398
        %v609 = vpop.f32.mrb[0].mxu0
        %v610 = vadd.f32 %v319, %v609
        %v611 = vpop.f32.mrb[0].mxu0
        %612 = vmatprep.mubr.f32.mxu0 0.0
        %613 = vmatmul.mubr.f32.gmra.mrb[0].mxu0 %v401
        %v614 = vpop.f32.mrb[0].mxu0
        %v615 = vadd.f32 %v319, %v614
        %v616 = vpop.f32.mrb[0].mxu0
        %617 = vmatprep.mubr.f32.mxu0 0.0
        %618 = vmatmul.mubr.f32.gmra.mrb[0].mxu0 %v404
        %v619 = vpop.f32.mrb[0].mxu0
        %v620 = vadd.f32 %v319, %v619
        %v621 = vpop.f32.mrb[0].mxu0
        %622 = vmatprep.mubr.f32.mxu0 0.0
        %623 = vmatmul.mubr.f32.gmra.mrb[0].mxu0 %v407
        %v624 = vpop.f32.mrb[0].mxu0
        %v625 = vadd.f32 %v319, %v624
        %v626 = vpop.f32.mrb[0].mxu0
        %627 = vmatprep.mubr.f32.mxu0 0.0
        %628 = vmatmul.mubr.f32.gmra.mrb[0].mxu0 %v410
        %v629 = vpop.f32.mrb[0].mxu0
        %v630 = vadd.f32 %v319, %v629
        %v631 = vpop.f32.mrb[0].mxu0
        %632 = vmatprep.mubr.f32.mxu0 0.0
        %633 = vmatmul.mubr.f32.gmra.mrb[0].mxu0 %v413
        %v634 = vpop.f32.mrb[0].mxu0
        %v635 = vadd.f32 %v319, %v634
        %v636 = vpop.f32.mrb[0].mxu0
        %637 = vmatprep.mubr.f32.mxu0 0.0
        %638 = vmatmul.mubr.f32.gmra.mrb[0].mxu0 %v416
        %v639 = vpop.f32.mrb[0].mxu0
        %v640 = vadd.f32 %v319, %v639
        %v641 = vpop.f32.mrb[0].mxu0
        %642 = vdwg.mxu0
        %v643 = vmax.f32 %v485, 0.0
        %v644 = vmax.f32 %v490, 0.0
        %v645 = vmax.f32 %v495, 0.0
        %v646 = vmax.f32 %v500, 0.0
        %v647 = vmax.f32 %v505, 0.0
        %v648 = vmax.f32 %v510, 0.0
        %v649 = vmax.f32 %v515, 0.0
        %v650 = vmax.f32 %v520, 0.0
        %v651 = vmax.f32 %v525, 0.0
        %v652 = vmax.f32 %v530, 0.0
        %v653 = vmax.f32 %v535, 0.0
        %v654 = vmax.f32 %v540, 0.0
        %v655 = vmax.f32 %v545, 0.0
        %v656 = vmax.f32 %v550, 0.0
        %v657 = vmax.f32 %v555, 0.0
        %v658 = vmax.f32 %v560, 0.0
        %v659 = vmax.f32 %v565, 0.0
        %v660 = vmax.f32 %v570, 0.0
        %v661 = vmax.f32 %v575, 0.0
        %v662 = vmax.f32 %v580, 0.0
        %v663 = vmax.f32 %v585, 0.0
        %v664 = vmax.f32 %v590, 0.0
        %v665 = vmax.f32 %v595, 0.0
        %v666 = vmax.f32 %v600, 0.0
        %v667 = vmax.f32 %v605, 0.0
        %v668 = vmax.f32 %v610, 0.0
        %v669 = vmax.f32 %v615, 0.0
        %v670 = vmax.f32 %v620, 0.0
        %v671 = vmax.f32 %v625, 0.0
        %v672 = vmax.f32 %v630, 0.0
        %v673 = vmax.f32 %v635, 0.0
        %v674 = vmax.f32 %v640, 0.0
        %v675 = vld [vmem:[%s3] sm:$0xff]
        %v676 = vld [vmem:[%s3 + $0x8] sm:$0xff]
        %v677 = vld [vmem:[%s3 + $0x10] sm:$0xff]
        %v678 = vld [vmem:[%s3 + $0x18] sm:$0xff]
        %v679 = vld [vmem:[%s3 + $0x20] sm:$0xff]
        %v680 = vld [vmem:[%s3 + $0x28] sm:$0xff]
        %v681 = vld [vmem:[%s3 + $0x30] sm:$0xff]
        %v682 = vld [vmem:[%s3 + $0x38] sm:$0xff]
        %v683 = vld [vmem:[%s3 + $0x40] sm:$0xff]
        %v684 = vld [vmem:[%s3 + $0x48] sm:$0xff]
        %v685 = vld [vmem:[%s3 + $0x50] sm:$0xff]
        %v686 = vld [vmem:[%s3 + $0x58] sm:$0xff]
        %v687 = vld [vmem:[%s3 + $0x60] sm:$0xff]
        %v688 = vld [vmem:[%s3 + $0x68] sm:$0xff]
        %v689 = vld [vmem:[%s3 + $0x70] sm:$0xff]
        %v690 = vld [vmem:[%s3 + $0x78] sm:$0xff]
        %v691 = vld [vmem:[%s4] sm:$0x1]
        %v693 = vlaneseq
        %v694 = vshrl.u32 %v693, 7
        %v695 = vsub.s32 0, %v694
        %v696 = vrot.slane %v691, %v695
        %698 = vmatprep.subr.mxu0 0.0
        %699 = vmatpush1.msra.mxu0 %v675
        %700 = vmatprep.subr.mxu0 0.0
        %701 = vmatpush1.msra.mxu0 %v676
        %702 = vmatprep.subr.mxu0 0.0
        %703 = vmatpush1.msra.mxu0 %v677
        %704 = vmatprep.subr.mxu0 0.0
        %705 = vmatpush1.msra.mxu0 %v678
        %706 = vmatprep.subr.mxu0 0.0
        %707 = vmatpush1.msra.mxu0 %v679
        %708 = vmatprep.subr.mxu0 0.0
        %709 = vmatpush1.msra.mxu0 %v680
        %710 = vmatprep.subr.mxu0 0.0
        %711 = vmatpush1.msra.mxu0 %v681
        %712 = vmatprep.subr.mxu0 0.0
        %713 = vmatpush1.msra.mxu0 %v682
        %714 = vmatprep.subr.mxu0 0.0
        %715 = vmatpush1.msra.mxu0 %v683
        %716 = vmatprep.subr.mxu0 0.0
        %717 = vmatpush1.msra.mxu0 %v684
        %718 = vmatprep.subr.mxu0 0.0
        %719 = vmatpush1.msra.mxu0 %v685
        %720 = vmatprep.subr.mxu0 0.0
        %721 = vmatpush1.msra.mxu0 %v686
        %722 = vmatprep.subr.mxu0 0.0
        %723 = vmatpush1.msra.mxu0 %v687
        %724 = vmatprep.subr.mxu0 0.0
        %725 = vmatpush1.msra.mxu0 %v688
        %726 = vmatprep.subr.mxu0 0.0
        %727 = vmatpush1.msra.mxu0 %v689
        %728 = vmatprep.subr.mxu0 0.0
        %729 = vmatpush1.msra.mxu0 %v690
        %730 = vmatprep.subr.mxu0 0.0
        %731 = vmatpush1.msra.mxu0 0.0
        %732 = vmatprep.subr.mxu0 0.0
        %733 = vmatpush1.msra.mxu0 0.0
        %734 = vmatprep.subr.mxu0 0.0
        %735 = vmatpush1.msra.mxu0 0.0
        %736 = vmatprep.subr.mxu0 0.0
        %737 = vmatpush1.msra.mxu0 0.0
        %738 = vmatprep.subr.mxu0 0.0
        %739 = vmatpush1.msra.mxu0 0.0
        %740 = vmatprep.subr.mxu0 0.0
        %741 = vmatpush1.msra.mxu0 0.0
        %742 = vmatprep.subr.mxu0 0.0
        %743 = vmatpush1.msra.mxu0 0.0
        %744 = vmatprep.subr.mxu0 0.0
        %745 = vmatpush1.msra.mxu0 0.0
        %746 = vmatprep.subr.mxu0 0.0
        %747 = vmatpush1.msra.mxu0 0.0
        %748 = vmatprep.subr.mxu0 0.0
        %749 = vmatpush1.msra.mxu0 0.0
        %750 = vmatprep.subr.mxu0 0.0
        %751 = vmatpush1.msra.mxu0 0.0
        %752 = vmatprep.subr.mxu0 0.0
        %753 = vmatpush1.msra.mxu0 0.0
        %754 = vmatprep.subr.mxu0 0.0
        %755 = vmatpush1.msra.mxu0 0.0
        %756 = vmatprep.subr.mxu0 0.0
        %757 = vmatpush1.msra.mxu0 0.0
        %758 = vmatprep.subr.mxu0 0.0
        %759 = vmatpush1.msra.mxu0 0.0
        %760 = vmatprep.subr.mxu0 0.0
        %761 = vmatpush1.msra.mxu0 0.0
        %762 = vmatprep.mubr.f32.mxu0 0.0
        %763 = vmatmul.mubr.f32.gmra.mrb[0].mxu0 %v643
        %v764 = vpop.f32.mrb[0].mxu0
        %v765 = vadd.f32 %v696, %v764
        %v766 = vpop.f32.mrb[0].mxu0
        %767 = vmatprep.mubr.f32.mxu0 0.0
        %768 = vmatmul.mubr.f32.gmra.mrb[0].mxu0 %v644
        %v769 = vpop.f32.mrb[0].mxu0
        %v770 = vadd.f32 %v696, %v769
        %v771 = vpop.f32.mrb[0].mxu0
        %772 = vmatprep.mubr.f32.mxu0 0.0
        %773 = vmatmul.mubr.f32.gmra.mrb[0].mxu0 %v645
        %v774 = vpop.f32.mrb[0].mxu0
        %v775 = vadd.f32 %v696, %v774
        %v776 = vpop.f32.mrb[0].mxu0
        %777 = vmatprep.mubr.f32.mxu0 0.0
        %778 = vmatmul.mubr.f32.gmra.mrb[0].mxu0 %v646
        %v779 = vpop.f32.mrb[0].mxu0
        %v780 = vadd.f32 %v696, %v779
        %v781 = vpop.f32.mrb[0].mxu0
        %782 = vmatprep.mubr.f32.mxu0 0.0
        %783 = vmatmul.mubr.f32.gmra.mrb[0].mxu0 %v647
        %v784 = vpop.f32.mrb[0].mxu0
        %v785 = vadd.f32 %v696, %v784
        %v786 = vpop.f32.mrb[0].mxu0
        %787 = vmatprep.mubr.f32.mxu0 0.0
        %788 = vmatmul.mubr.f32.gmra.mrb[0].mxu0 %v648
        %v789 = vpop.f32.mrb[0].mxu0
        %v790 = vadd.f32 %v696, %v789
        %v791 = vpop.f32.mrb[0].mxu0
        %792 = vmatprep.mubr.f32.mxu0 0.0
        %793 = vmatmul.mubr.f32.gmra.mrb[0].mxu0 %v649
        %v794 = vpop.f32.mrb[0].mxu0
        %v795 = vadd.f32 %v696, %v794
        %v796 = vpop.f32.mrb[0].mxu0
        %797 = vmatprep.mubr.f32.mxu0 0.0
        %798 = vmatmul.mubr.f32.gmra.mrb[0].mxu0 %v650
        %v799 = vpop.f32.mrb[0].mxu0
        %v800 = vadd.f32 %v696, %v799
        %v801 = vpop.f32.mrb[0].mxu0
        %802 = vmatprep.mubr.f32.mxu0 0.0
        %803 = vmatmul.mubr.f32.gmra.mrb[0].mxu0 %v651
        %v804 = vpop.f32.mrb[0].mxu0
        %v805 = vadd.f32 %v696, %v804
        %v806 = vpop.f32.mrb[0].mxu0
        %807 = vmatprep.mubr.f32.mxu0 0.0
        %808 = vmatmul.mubr.f32.gmra.mrb[0].mxu0 %v652
        %v809 = vpop.f32.mrb[0].mxu0
        %v810 = vadd.f32 %v696, %v809
        %v811 = vpop.f32.mrb[0].mxu0
        %812 = vmatprep.mubr.f32.mxu0 0.0
        %813 = vmatmul.mubr.f32.gmra.mrb[0].mxu0 %v653
        %v814 = vpop.f32.mrb[0].mxu0
        %v815 = vadd.f32 %v696, %v814
        %v816 = vpop.f32.mrb[0].mxu0
        %817 = vmatprep.mubr.f32.mxu0 0.0
        %818 = vmatmul.mubr.f32.gmra.mrb[0].mxu0 %v654
        %v819 = vpop.f32.mrb[0].mxu0
        %v820 = vadd.f32 %v696, %v819
        %v821 = vpop.f32.mrb[0].mxu0
        %822 = vmatprep.mubr.f32.mxu0 0.0
        %823 = vmatmul.mubr.f32.gmra.mrb[0].mxu0 %v655
        %v824 = vpop.f32.mrb[0].mxu0
        %v825 = vadd.f32 %v696, %v824
        %v826 = vpop.f32.mrb[0].mxu0
        %827 = vmatprep.mubr.f32.mxu0 0.0
        %828 = vmatmul.mubr.f32.gmra.mrb[0].mxu0 %v656
        %v829 = vpop.f32.mrb[0].mxu0
        %v830 = vadd.f32 %v696, %v829
        %v831 = vpop.f32.mrb[0].mxu0
        %832 = vmatprep.mubr.f32.mxu0 0.0
        %833 = vmatmul.mubr.f32.gmra.mrb[0].mxu0 %v657
        %v834 = vpop.f32.mrb[0].mxu0
        %v835 = vadd.f32 %v696, %v834
        %v836 = vpop.f32.mrb[0].mxu0
        %837 = vmatprep.mubr.f32.mxu0 0.0
        %838 = vmatmul.mubr.f32.gmra.mrb[0].mxu0 %v658
        %v839 = vpop.f32.mrb[0].mxu0
        %v840 = vadd.f32 %v696, %v839
        %v841 = vpop.f32.mrb[0].mxu0
        %842 = vmatprep.mubr.f32.mxu0 0.0
        %843 = vmatmul.mubr.f32.gmra.mrb[0].mxu0 %v659
        %v844 = vpop.f32.mrb[0].mxu0
        %v845 = vadd.f32 %v696, %v844
        %v846 = vpop.f32.mrb[0].mxu0
        %847 = vmatprep.mubr.f32.mxu0 0.0
        %848 = vmatmul.mubr.f32.gmra.mrb[0].mxu0 %v660
        %v849 = vpop.f32.mrb[0].mxu0
        %v850 = vadd.f32 %v696, %v849
        %v851 = vpop.f32.mrb[0].mxu0
        %852 = vmatprep.mubr.f32.mxu0 0.0
        %853 = vmatmul.mubr.f32.gmra.mrb[0].mxu0 %v661
        %v854 = vpop.f32.mrb[0].mxu0
        %v855 = vadd.f32 %v696, %v854
        %v856 = vpop.f32.mrb[0].mxu0
        %857 = vmatprep.mubr.f32.mxu0 0.0
        %858 = vmatmul.mubr.f32.gmra.mrb[0].mxu0 %v662
        %v859 = vpop.f32.mrb[0].mxu0
        %v860 = vadd.f32 %v696, %v859
        %v861 = vpop.f32.mrb[0].mxu0
        %862 = vmatprep.mubr.f32.mxu0 0.0
        %863 = vmatmul.mubr.f32.gmra.mrb[0].mxu0 %v663
        %v864 = vpop.f32.mrb[0].mxu0
        %v865 = vadd.f32 %v696, %v864
        %v866 = vpop.f32.mrb[0].mxu0
        %867 = vmatprep.mubr.f32.mxu0 0.0
        %868 = vmatmul.mubr.f32.gmra.mrb[0].mxu0 %v664
        %v869 = vpop.f32.mrb[0].mxu0
        %v870 = vadd.f32 %v696, %v869
        %v871 = vpop.f32.mrb[0].mxu0
        %872 = vmatprep.mubr.f32.mxu0 0.0
        %873 = vmatmul.mubr.f32.gmra.mrb[0].mxu0 %v665
        %v874 = vpop.f32.mrb[0].mxu0
        %v875 = vadd.f32 %v696, %v874
        %v876 = vpop.f32.mrb[0].mxu0
        %877 = vmatprep.mubr.f32.mxu0 0.0
        %878 = vmatmul.mubr.f32.gmra.mrb[0].mxu0 %v666
        %v879 = vpop.f32.mrb[0].mxu0
        %v880 = vadd.f32 %v696, %v879
        %v881 = vpop.f32.mrb[0].mxu0
        %882 = vmatprep.mubr.f32.mxu0 0.0
        %883 = vmatmul.mubr.f32.gmra.mrb[0].mxu0 %v667
        %v884 = vpop.f32.mrb[0].mxu0
        %v885 = vadd.f32 %v696, %v884
        %v886 = vpop.f32.mrb[0].mxu0
        %887 = vmatprep.mubr.f32.mxu0 0.0
        %888 = vmatmul.mubr.f32.gmra.mrb[0].mxu0 %v668
        %v889 = vpop.f32.mrb[0].mxu0
        %v890 = vadd.f32 %v696, %v889
        %v891 = vpop.f32.mrb[0].mxu0
        %892 = vmatprep.mubr.f32.mxu0 0.0
        %893 = vmatmul.mubr.f32.gmra.mrb[0].mxu0 %v669
        %v894 = vpop.f32.mrb[0].mxu0
        %v895 = vadd.f32 %v696, %v894
        %v896 = vpop.f32.mrb[0].mxu0
        %897 = vmatprep.mubr.f32.mxu0 0.0
        %898 = vmatmul.mubr.f32.gmra.mrb[0].mxu0 %v670
        %v899 = vpop.f32.mrb[0].mxu0
        %v900 = vadd.f32 %v696, %v899
        %v901 = vpop.f32.mrb[0].mxu0
        %902 = vmatprep.mubr.f32.mxu0 0.0
        %903 = vmatmul.mubr.f32.gmra.mrb[0].mxu0 %v671
        %v904 = vpop.f32.mrb[0].mxu0
        %v905 = vadd.f32 %v696, %v904
        %v906 = vpop.f32.mrb[0].mxu0
        %907 = vmatprep.mubr.f32.mxu0 0.0
        %908 = vmatmul.mubr.f32.gmra.mrb[0].mxu0 %v672
        %v909 = vpop.f32.mrb[0].mxu0
        %v910 = vadd.f32 %v696, %v909
        %v911 = vpop.f32.mrb[0].mxu0
        %912 = vmatprep.mubr.f32.mxu0 0.0
        %913 = vmatmul.mubr.f32.gmra.mrb[0].mxu0 %v673
        %v914 = vpop.f32.mrb[0].mxu0
        %v915 = vadd.f32 %v696, %v914
        %v916 = vpop.f32.mrb[0].mxu0
        %917 = vmatprep.mubr.f32.mxu0 0.0
        %918 = vmatmul.mubr.f32.gmra.mrb[0].mxu0 %v674
        %v919 = vpop.f32.mrb[0].mxu0
        %v920 = vadd.f32 %v696, %v919
        %v921 = vpop.f32.mrb[0].mxu0
        %922 = vdwg.mxu0
        %v923 = vmax.f32 %v765, 0.0
        %v924 = vmax.f32 %v770, 0.0
        %v925 = vmax.f32 %v775, 0.0
        %v926 = vmax.f32 %v780, 0.0
        %v927 = vmax.f32 %v785, 0.0
        %v928 = vmax.f32 %v790, 0.0
        %v929 = vmax.f32 %v795, 0.0
        %v930 = vmax.f32 %v800, 0.0
        %v931 = vmax.f32 %v805, 0.0
        %v932 = vmax.f32 %v810, 0.0
        %v933 = vmax.f32 %v815, 0.0
        %v934 = vmax.f32 %v820, 0.0
        %v935 = vmax.f32 %v825, 0.0
        %v936 = vmax.f32 %v830, 0.0
        %v937 = vmax.f32 %v835, 0.0
        %v938 = vmax.f32 %v840, 0.0
        %v939 = vmax.f32 %v845, 0.0
        %v940 = vmax.f32 %v850, 0.0
        %v941 = vmax.f32 %v855, 0.0
        %v942 = vmax.f32 %v860, 0.0
        %v943 = vmax.f32 %v865, 0.0
        %v944 = vmax.f32 %v870, 0.0
        %v945 = vmax.f32 %v875, 0.0
        %v946 = vmax.f32 %v880, 0.0
        %v947 = vmax.f32 %v885, 0.0
        %v948 = vmax.f32 %v890, 0.0
        %v949 = vmax.f32 %v895, 0.0
        %v950 = vmax.f32 %v900, 0.0
        %v951 = vmax.f32 %v905, 0.0
        %v952 = vmax.f32 %v910, 0.0
        %v953 = vmax.f32 %v915, 0.0
        %v954 = vmax.f32 %v920, 0.0
        %s955 = scalar_lea.vmem %s3, 128
        %v956 = vld [vmem:[%s955] sm:$0xff]
        %v957 = vld [vmem:[%s955 + $0x8] sm:$0xff]
        %v958 = vld [vmem:[%s955 + $0x10] sm:$0xff]
        %v959 = vld [vmem:[%s955 + $0x18] sm:$0xff]
        %v960 = vld [vmem:[%s955 + $0x20] sm:$0xff]
        %v961 = vld [vmem:[%s955 + $0x28] sm:$0xff]
        %v962 = vld [vmem:[%s955 + $0x30] sm:$0xff]
        %v963 = vld [vmem:[%s955 + $0x38] sm:$0xff]
        %v964 = vld [vmem:[%s955 + $0x40] sm:$0xff]
        %v965 = vld [vmem:[%s955 + $0x48] sm:$0xff]
        %v966 = vld [vmem:[%s955 + $0x50] sm:$0xff]
        %v967 = vld [vmem:[%s955 + $0x58] sm:$0xff]
        %v968 = vld [vmem:[%s955 + $0x60] sm:$0xff]
        %v969 = vld [vmem:[%s955 + $0x68] sm:$0xff]
        %v970 = vld [vmem:[%s955 + $0x70] sm:$0xff]
        %v971 = vld [vmem:[%s955 + $0x78] sm:$0xff]
        %s972 = scalar_lea.vmem %s4, 1
        %v973 = vld [vmem:[%s972] sm:$0x1]
        %v975 = vlaneseq
        %v976 = vshrl.u32 %v975, 7
        %v977 = vsub.s32 0, %v976
        %v978 = vrot.slane %v973, %v977
        %980 = vmatprep.subr.mxu0 0.0
        %981 = vmatpush1.msra.mxu0 %v956
        %982 = vmatprep.subr.mxu0 0.0
        %983 = vmatpush1.msra.mxu0 %v957
        %984 = vmatprep.subr.mxu0 0.0
        %985 = vmatpush1.msra.mxu0 %v958
        %986 = vmatprep.subr.mxu0 0.0
        %987 = vmatpush1.msra.mxu0 %v959
        %988 = vmatprep.subr.mxu0 0.0
        %989 = vmatpush1.msra.mxu0 %v960
        %990 = vmatprep.subr.mxu0 0.0
        %991 = vmatpush1.msra.mxu0 %v961
        %992 = vmatprep.subr.mxu0 0.0
        %993 = vmatpush1.msra.mxu0 %v962
        %994 = vmatprep.subr.mxu0 0.0
        %995 = vmatpush1.msra.mxu0 %v963
        %996 = vmatprep.subr.mxu0 0.0
        %997 = vmatpush1.msra.mxu0 %v964
        %998 = vmatprep.subr.mxu0 0.0
        %999 = vmatpush1.msra.mxu0 %v965
        %1000 = vmatprep.subr.mxu0 0.0
        %1001 = vmatpush1.msra.mxu0 %v966
        %1002 = vmatprep.subr.mxu0 0.0
        %1003 = vmatpush1.msra.mxu0 %v967
        %1004 = vmatprep.subr.mxu0 0.0
        %1005 = vmatpush1.msra.mxu0 %v968
        %1006 = vmatprep.subr.mxu0 0.0
        %1007 = vmatpush1.msra.mxu0 %v969
        %1008 = vmatprep.subr.mxu0 0.0
        %1009 = vmatpush1.msra.mxu0 %v970
        %1010 = vmatprep.subr.mxu0 0.0
        %1011 = vmatpush1.msra.mxu0 %v971
        %1012 = vmatprep.subr.mxu0 0.0
        %1013 = vmatpush1.msra.mxu0 0.0
        %1014 = vmatprep.subr.mxu0 0.0
        %1015 = vmatpush1.msra.mxu0 0.0
        %1016 = vmatprep.subr.mxu0 0.0
        %1017 = vmatpush1.msra.mxu0 0.0
        %1018 = vmatprep.subr.mxu0 0.0
        %1019 = vmatpush1.msra.mxu0 0.0
        %1020 = vmatprep.subr.mxu0 0.0
        %1021 = vmatpush1.msra.mxu0 0.0
        %1022 = vmatprep.subr.mxu0 0.0
        %1023 = vmatpush1.msra.mxu0 0.0
        %1024 = vmatprep.subr.mxu0 0.0
        %1025 = vmatpush1.msra.mxu0 0.0
        %1026 = vmatprep.subr.mxu0 0.0
        %1027 = vmatpush1.msra.mxu0 0.0
        %1028 = vmatprep.subr.mxu0 0.0
        %1029 = vmatpush1.msra.mxu0 0.0
        %1030 = vmatprep.subr.mxu0 0.0
        %1031 = vmatpush1.msra.mxu0 0.0
        %1032 = vmatprep.subr.mxu0 0.0
        %1033 = vmatpush1.msra.mxu0 0.0
        %1034 = vmatprep.subr.mxu0 0.0
        %1035 = vmatpush1.msra.mxu0 0.0
        %1036 = vmatprep.subr.mxu0 0.0
        %1037 = vmatpush1.msra.mxu0 0.0
        %1038 = vmatprep.subr.mxu0 0.0
        %1039 = vmatpush1.msra.mxu0 0.0
        %1040 = vmatprep.subr.mxu0 0.0
        %1041 = vmatpush1.msra.mxu0 0.0
        %1042 = vmatprep.subr.mxu0 0.0
        %1043 = vmatpush1.msra.mxu0 0.0
        %1044 = vmatprep.mubr.f32.mxu0 0.0
        %1045 = vmatmul.mubr.f32.gmra.mrb[0].mxu0 %v923
        %v1046 = vpop.f32.mrb[0].mxu0
        %v1047 = vadd.f32 %v978, %v1046
        %v1048 = vpop.f32.mrb[0].mxu0
        %1049 = vmatprep.mubr.f32.mxu0 0.0
        %1050 = vmatmul.mubr.f32.gmra.mrb[0].mxu0 %v924
        %v1051 = vpop.f32.mrb[0].mxu0
        %v1052 = vadd.f32 %v978, %v1051
        %v1053 = vpop.f32.mrb[0].mxu0
        %1054 = vmatprep.mubr.f32.mxu0 0.0
        %1055 = vmatmul.mubr.f32.gmra.mrb[0].mxu0 %v925
        %v1056 = vpop.f32.mrb[0].mxu0
        %v1057 = vadd.f32 %v978, %v1056
        %v1058 = vpop.f32.mrb[0].mxu0
        %1059 = vmatprep.mubr.f32.mxu0 0.0
        %1060 = vmatmul.mubr.f32.gmra.mrb[0].mxu0 %v926
        %v1061 = vpop.f32.mrb[0].mxu0
        %v1062 = vadd.f32 %v978, %v1061
        %v1063 = vpop.f32.mrb[0].mxu0
        %1064 = vmatprep.mubr.f32.mxu0 0.0
        %1065 = vmatmul.mubr.f32.gmra.mrb[0].mxu0 %v927
        %v1066 = vpop.f32.mrb[0].mxu0
        %v1067 = vadd.f32 %v978, %v1066
        %v1068 = vpop.f32.mrb[0].mxu0
        %1069 = vmatprep.mubr.f32.mxu0 0.0
        %1070 = vmatmul.mubr.f32.gmra.mrb[0].mxu0 %v928
        %v1071 = vpop.f32.mrb[0].mxu0
        %v1072 = vadd.f32 %v978, %v1071
        %v1073 = vpop.f32.mrb[0].mxu0
        %1074 = vmatprep.mubr.f32.mxu0 0.0
        %1075 = vmatmul.mubr.f32.gmra.mrb[0].mxu0 %v929
        %v1076 = vpop.f32.mrb[0].mxu0
        %v1077 = vadd.f32 %v978, %v1076
        %v1078 = vpop.f32.mrb[0].mxu0
        %1079 = vmatprep.mubr.f32.mxu0 0.0
        %1080 = vmatmul.mubr.f32.gmra.mrb[0].mxu0 %v930
        %v1081 = vpop.f32.mrb[0].mxu0
        %v1082 = vadd.f32 %v978, %v1081
        %v1083 = vpop.f32.mrb[0].mxu0
        %1084 = vmatprep.mubr.f32.mxu0 0.0
        %1085 = vmatmul.mubr.f32.gmra.mrb[0].mxu0 %v931
        %v1086 = vpop.f32.mrb[0].mxu0
        %v1087 = vadd.f32 %v978, %v1086
        %v1088 = vpop.f32.mrb[0].mxu0
        %1089 = vmatprep.mubr.f32.mxu0 0.0
        %1090 = vmatmul.mubr.f32.gmra.mrb[0].mxu0 %v932
        %v1091 = vpop.f32.mrb[0].mxu0
        %v1092 = vadd.f32 %v978, %v1091
        %v1093 = vpop.f32.mrb[0].mxu0
        %1094 = vmatprep.mubr.f32.mxu0 0.0
        %1095 = vmatmul.mubr.f32.gmra.mrb[0].mxu0 %v933
        %v1096 = vpop.f32.mrb[0].mxu0
        %v1097 = vadd.f32 %v978, %v1096
        %v1098 = vpop.f32.mrb[0].mxu0
        %1099 = vmatprep.mubr.f32.mxu0 0.0
        %1100 = vmatmul.mubr.f32.gmra.mrb[0].mxu0 %v934
        %v1101 = vpop.f32.mrb[0].mxu0
        %v1102 = vadd.f32 %v978, %v1101
        %v1103 = vpop.f32.mrb[0].mxu0
        %1104 = vmatprep.mubr.f32.mxu0 0.0
        %1105 = vmatmul.mubr.f32.gmra.mrb[0].mxu0 %v935
        %v1106 = vpop.f32.mrb[0].mxu0
        %v1107 = vadd.f32 %v978, %v1106
        %v1108 = vpop.f32.mrb[0].mxu0
        %1109 = vmatprep.mubr.f32.mxu0 0.0
        %1110 = vmatmul.mubr.f32.gmra.mrb[0].mxu0 %v936
        %v1111 = vpop.f32.mrb[0].mxu0
        %v1112 = vadd.f32 %v978, %v1111
        %v1113 = vpop.f32.mrb[0].mxu0
        %1114 = vmatprep.mubr.f32.mxu0 0.0
        %1115 = vmatmul.mubr.f32.gmra.mrb[0].mxu0 %v937
        %v1116 = vpop.f32.mrb[0].mxu0
        %v1117 = vadd.f32 %v978, %v1116
        %v1118 = vpop.f32.mrb[0].mxu0
        %1119 = vmatprep.mubr.f32.mxu0 0.0
        %1120 = vmatmul.mubr.f32.gmra.mrb[0].mxu0 %v938
        %v1121 = vpop.f32.mrb[0].mxu0
        %v1122 = vadd.f32 %v978, %v1121
        %v1123 = vpop.f32.mrb[0].mxu0
        %1124 = vmatprep.mubr.f32.mxu0 0.0
        %1125 = vmatmul.mubr.f32.gmra.mrb[0].mxu0 %v939
        %v1126 = vpop.f32.mrb[0].mxu0
        %v1127 = vadd.f32 %v978, %v1126
        %v1128 = vpop.f32.mrb[0].mxu0
        %1129 = vmatprep.mubr.f32.mxu0 0.0
        %1130 = vmatmul.mubr.f32.gmra.mrb[0].mxu0 %v940
        %v1131 = vpop.f32.mrb[0].mxu0
        %v1132 = vadd.f32 %v978, %v1131
        %v1133 = vpop.f32.mrb[0].mxu0
        %1134 = vmatprep.mubr.f32.mxu0 0.0
        %1135 = vmatmul.mubr.f32.gmra.mrb[0].mxu0 %v941
        %v1136 = vpop.f32.mrb[0].mxu0
        %v1137 = vadd.f32 %v978, %v1136
        %v1138 = vpop.f32.mrb[0].mxu0
        %1139 = vmatprep.mubr.f32.mxu0 0.0
        %1140 = vmatmul.mubr.f32.gmra.mrb[0].mxu0 %v942
        %v1141 = vpop.f32.mrb[0].mxu0
        %v1142 = vadd.f32 %v978, %v1141
        %v1143 = vpop.f32.mrb[0].mxu0
        %1144 = vmatprep.mubr.f32.mxu0 0.0
        %1145 = vmatmul.mubr.f32.gmra.mrb[0].mxu0 %v943
        %v1146 = vpop.f32.mrb[0].mxu0
        %v1147 = vadd.f32 %v978, %v1146
        %v1148 = vpop.f32.mrb[0].mxu0
        %1149 = vmatprep.mubr.f32.mxu0 0.0
        %1150 = vmatmul.mubr.f32.gmra.mrb[0].mxu0 %v944
        %v1151 = vpop.f32.mrb[0].mxu0
        %v1152 = vadd.f32 %v978, %v1151
        %v1153 = vpop.f32.mrb[0].mxu0
        %1154 = vmatprep.mubr.f32.mxu0 0.0
        %1155 = vmatmul.mubr.f32.gmra.mrb[0].mxu0 %v945
        %v1156 = vpop.f32.mrb[0].mxu0
        %v1157 = vadd.f32 %v978, %v1156
        %v1158 = vpop.f32.mrb[0].mxu0
        %1159 = vmatprep.mubr.f32.mxu0 0.0
        %1160 = vmatmul.mubr.f32.gmra.mrb[0].mxu0 %v946
        %v1161 = vpop.f32.mrb[0].mxu0
        %v1162 = vadd.f32 %v978, %v1161
        %v1163 = vpop.f32.mrb[0].mxu0
        %1164 = vmatprep.mubr.f32.mxu0 0.0
        %1165 = vmatmul.mubr.f32.gmra.mrb[0].mxu0 %v947
        %v1166 = vpop.f32.mrb[0].mxu0
        %v1167 = vadd.f32 %v978, %v1166
        %v1168 = vpop.f32.mrb[0].mxu0
        %1169 = vmatprep.mubr.f32.mxu0 0.0
        %1170 = vmatmul.mubr.f32.gmra.mrb[0].mxu0 %v948
        %v1171 = vpop.f32.mrb[0].mxu0
        %v1172 = vadd.f32 %v978, %v1171
        %v1173 = vpop.f32.mrb[0].mxu0
        %1174 = vmatprep.mubr.f32.mxu0 0.0
        %1175 = vmatmul.mubr.f32.gmra.mrb[0].mxu0 %v949
        %v1176 = vpop.f32.mrb[0].mxu0
        %v1177 = vadd.f32 %v978, %v1176
        %v1178 = vpop.f32.mrb[0].mxu0
        %1179 = vmatprep.mubr.f32.mxu0 0.0
        %1180 = vmatmul.mubr.f32.gmra.mrb[0].mxu0 %v950
        %v1181 = vpop.f32.mrb[0].mxu0
        %v1182 = vadd.f32 %v978, %v1181
        %v1183 = vpop.f32.mrb[0].mxu0
        %1184 = vmatprep.mubr.f32.mxu0 0.0
        %1185 = vmatmul.mubr.f32.gmra.mrb[0].mxu0 %v951
        %v1186 = vpop.f32.mrb[0].mxu0
        %v1187 = vadd.f32 %v978, %v1186
        %v1188 = vpop.f32.mrb[0].mxu0
        %1189 = vmatprep.mubr.f32.mxu0 0.0
        %1190 = vmatmul.mubr.f32.gmra.mrb[0].mxu0 %v952
        %v1191 = vpop.f32.mrb[0].mxu0
        %v1192 = vadd.f32 %v978, %v1191
        %v1193 = vpop.f32.mrb[0].mxu0
        %1194 = vmatprep.mubr.f32.mxu0 0.0
        %1195 = vmatmul.mubr.f32.gmra.mrb[0].mxu0 %v953
        %v1196 = vpop.f32.mrb[0].mxu0
        %v1197 = vadd.f32 %v978, %v1196
        %v1198 = vpop.f32.mrb[0].mxu0
        %1199 = vmatprep.mubr.f32.mxu0 0.0
        %1200 = vmatmul.mubr.f32.gmra.mrb[0].mxu0 %v954
        %v1201 = vpop.f32.mrb[0].mxu0
        %v1202 = vadd.f32 %v978, %v1201
        %v1203 = vpop.f32.mrb[0].mxu0
        %1204 = vdwg.mxu0
        %v1205 = vmax.f32 %v1047, 0.0
        %v1206 = vmax.f32 %v1052, 0.0
        %v1207 = vmax.f32 %v1057, 0.0
        %v1208 = vmax.f32 %v1062, 0.0
        %v1209 = vmax.f32 %v1067, 0.0
        %v1210 = vmax.f32 %v1072, 0.0
        %v1211 = vmax.f32 %v1077, 0.0
        %v1212 = vmax.f32 %v1082, 0.0
        %v1213 = vmax.f32 %v1087, 0.0
        %v1214 = vmax.f32 %v1092, 0.0
        %v1215 = vmax.f32 %v1097, 0.0
        %v1216 = vmax.f32 %v1102, 0.0
        %v1217 = vmax.f32 %v1107, 0.0
        %v1218 = vmax.f32 %v1112, 0.0
        %v1219 = vmax.f32 %v1117, 0.0
        %v1220 = vmax.f32 %v1122, 0.0
        %v1221 = vmax.f32 %v1127, 0.0
        %v1222 = vmax.f32 %v1132, 0.0
        %v1223 = vmax.f32 %v1137, 0.0
        %v1224 = vmax.f32 %v1142, 0.0
        %v1225 = vmax.f32 %v1147, 0.0
        %v1226 = vmax.f32 %v1152, 0.0
        %v1227 = vmax.f32 %v1157, 0.0
        %v1228 = vmax.f32 %v1162, 0.0
        %v1229 = vmax.f32 %v1167, 0.0
        %v1230 = vmax.f32 %v1172, 0.0
        %v1231 = vmax.f32 %v1177, 0.0
        %v1232 = vmax.f32 %v1182, 0.0
        %v1233 = vmax.f32 %v1187, 0.0
        %v1234 = vmax.f32 %v1192, 0.0
        %v1235 = vmax.f32 %v1197, 0.0
        %v1236 = vmax.f32 %v1202, 0.0
        %v1237 = vld [vmem:[%s5] sm:$0xff]
        %v1238 = vld [vmem:[%s5 + $0x8] sm:$0xff]
        %v1239 = vld [vmem:[%s5 + $0x10] sm:$0xff]
        %v1240 = vld [vmem:[%s5 + $0x18] sm:$0xff]
        %v1241 = vld [vmem:[%s5 + $0x20] sm:$0xff]
        %v1242 = vld [vmem:[%s5 + $0x28] sm:$0xff]
        %v1243 = vld [vmem:[%s5 + $0x30] sm:$0xff]
        %v1244 = vld [vmem:[%s5 + $0x38] sm:$0xff]
        %v1245 = vld [vmem:[%s5 + $0x40] sm:$0xff]
        %v1246 = vld [vmem:[%s5 + $0x48] sm:$0xff]
        %v1247 = vld [vmem:[%s5 + $0x50] sm:$0xff]
        %v1248 = vld [vmem:[%s5 + $0x58] sm:$0xff]
        %v1249 = vld [vmem:[%s5 + $0x60] sm:$0xff]
        %v1250 = vld [vmem:[%s5 + $0x68] sm:$0xff]
        %v1251 = vld [vmem:[%s5 + $0x70] sm:$0xff]
        %v1252 = vld [vmem:[%s5 + $0x78] sm:$0xff]
        %v1253 = vld [vmem:[%s6] sm:$0x1]
        %v1255 = vlaneseq
        %v1256 = vshrl.u32 %v1255, 7
        %v1257 = vsub.s32 0, %v1256
        %v1258 = vrot.slane %v1253, %v1257
        %1260 = vmatprep.subr.mxu0 0.0
        %1261 = vmatpush1.msra.mxu0 %v1237
        %1262 = vmatprep.subr.mxu0 0.0
        %1263 = vmatpush1.msra.mxu0 %v1238
        %1264 = vmatprep.subr.mxu0 0.0
        %1265 = vmatpush1.msra.mxu0 %v1239
        %1266 = vmatprep.subr.mxu0 0.0
        %1267 = vmatpush1.msra.mxu0 %v1240
        %1268 = vmatprep.subr.mxu0 0.0
        %1269 = vmatpush1.msra.mxu0 %v1241
        %1270 = vmatprep.subr.mxu0 0.0
        %1271 = vmatpush1.msra.mxu0 %v1242
        %1272 = vmatprep.subr.mxu0 0.0
        %1273 = vmatpush1.msra.mxu0 %v1243
        %1274 = vmatprep.subr.mxu0 0.0
        %1275 = vmatpush1.msra.mxu0 %v1244
        %1276 = vmatprep.subr.mxu0 0.0
        %1277 = vmatpush1.msra.mxu0 %v1245
        %1278 = vmatprep.subr.mxu0 0.0
        %1279 = vmatpush1.msra.mxu0 %v1246
        %1280 = vmatprep.subr.mxu0 0.0
        %1281 = vmatpush1.msra.mxu0 %v1247
        %1282 = vmatprep.subr.mxu0 0.0
        %1283 = vmatpush1.msra.mxu0 %v1248
        %1284 = vmatprep.subr.mxu0 0.0
        %1285 = vmatpush1.msra.mxu0 %v1249
        %1286 = vmatprep.subr.mxu0 0.0
        %1287 = vmatpush1.msra.mxu0 %v1250
        %1288 = vmatprep.subr.mxu0 0.0
        %1289 = vmatpush1.msra.mxu0 %v1251
        %1290 = vmatprep.subr.mxu0 0.0
        %1291 = vmatpush1.msra.mxu0 %v1252
        %1292 = vmatprep.subr.mxu0 0.0
        %1293 = vmatpush1.msra.mxu0 0.0
        %1294 = vmatprep.subr.mxu0 0.0
        %1295 = vmatpush1.msra.mxu0 0.0
        %1296 = vmatprep.subr.mxu0 0.0
        %1297 = vmatpush1.msra.mxu0 0.0
        %1298 = vmatprep.subr.mxu0 0.0
        %1299 = vmatpush1.msra.mxu0 0.0
        %1300 = vmatprep.subr.mxu0 0.0
        %1301 = vmatpush1.msra.mxu0 0.0
        %1302 = vmatprep.subr.mxu0 0.0
        %1303 = vmatpush1.msra.mxu0 0.0
        %1304 = vmatprep.subr.mxu0 0.0
        %1305 = vmatpush1.msra.mxu0 0.0
        %1306 = vmatprep.subr.mxu0 0.0
        %1307 = vmatpush1.msra.mxu0 0.0
        %1308 = vmatprep.subr.mxu0 0.0
        %1309 = vmatpush1.msra.mxu0 0.0
        %1310 = vmatprep.subr.mxu0 0.0
        %1311 = vmatpush1.msra.mxu0 0.0
        %1312 = vmatprep.subr.mxu0 0.0
        %1313 = vmatpush1.msra.mxu0 0.0
        %1314 = vmatprep.subr.mxu0 0.0
        %1315 = vmatpush1.msra.mxu0 0.0
        %1316 = vmatprep.subr.mxu0 0.0
        %1317 = vmatpush1.msra.mxu0 0.0
        %1318 = vmatprep.subr.mxu0 0.0
        %1319 = vmatpush1.msra.mxu0 0.0
        %1320 = vmatprep.subr.mxu0 0.0
        %1321 = vmatpush1.msra.mxu0 0.0
        %1322 = vmatprep.subr.mxu0 0.0
        %1323 = vmatpush1.msra.mxu0 0.0
        %1324 = vmatprep.mubr.f32.mxu0 0.0
        %1325 = vmatmul.mubr.f32.gmra.mrb[0].mxu0 %v1205
        %v1326 = vpop.f32.mrb[0].mxu0
        %v1327 = vadd.f32 %v1258, %v1326
        %v1328 = vpop.f32.mrb[0].mxu0
        %1329 = vmatprep.mubr.f32.mxu0 0.0
        %1330 = vmatmul.mubr.f32.gmra.mrb[0].mxu0 %v1206
        %v1331 = vpop.f32.mrb[0].mxu0
        %v1332 = vadd.f32 %v1258, %v1331
        %v1333 = vpop.f32.mrb[0].mxu0
        %1334 = vmatprep.mubr.f32.mxu0 0.0
        %1335 = vmatmul.mubr.f32.gmra.mrb[0].mxu0 %v1207
        %v1336 = vpop.f32.mrb[0].mxu0
        %v1337 = vadd.f32 %v1258, %v1336
        %v1338 = vpop.f32.mrb[0].mxu0
        %1339 = vmatprep.mubr.f32.mxu0 0.0
        %1340 = vmatmul.mubr.f32.gmra.mrb[0].mxu0 %v1208
        %v1341 = vpop.f32.mrb[0].mxu0
        %v1342 = vadd.f32 %v1258, %v1341
        %v1343 = vpop.f32.mrb[0].mxu0
        %1344 = vmatprep.mubr.f32.mxu0 0.0
        %1345 = vmatmul.mubr.f32.gmra.mrb[0].mxu0 %v1209
        %v1346 = vpop.f32.mrb[0].mxu0
        %v1347 = vadd.f32 %v1258, %v1346
        %v1348 = vpop.f32.mrb[0].mxu0
        %1349 = vmatprep.mubr.f32.mxu0 0.0
        %1350 = vmatmul.mubr.f32.gmra.mrb[0].mxu0 %v1210
        %v1351 = vpop.f32.mrb[0].mxu0
        %v1352 = vadd.f32 %v1258, %v1351
        %v1353 = vpop.f32.mrb[0].mxu0
        %1354 = vmatprep.mubr.f32.mxu0 0.0
        %1355 = vmatmul.mubr.f32.gmra.mrb[0].mxu0 %v1211
        %v1356 = vpop.f32.mrb[0].mxu0
        %v1357 = vadd.f32 %v1258, %v1356
        %v1358 = vpop.f32.mrb[0].mxu0
        %1359 = vmatprep.mubr.f32.mxu0 0.0
        %1360 = vmatmul.mubr.f32.gmra.mrb[0].mxu0 %v1212
        %v1361 = vpop.f32.mrb[0].mxu0
        %v1362 = vadd.f32 %v1258, %v1361
        %v1363 = vpop.f32.mrb[0].mxu0
        %1364 = vmatprep.mubr.f32.mxu0 0.0
        %1365 = vmatmul.mubr.f32.gmra.mrb[0].mxu0 %v1213
        %v1366 = vpop.f32.mrb[0].mxu0
        %v1367 = vadd.f32 %v1258, %v1366
        %v1368 = vpop.f32.mrb[0].mxu0
        %1369 = vmatprep.mubr.f32.mxu0 0.0
        %1370 = vmatmul.mubr.f32.gmra.mrb[0].mxu0 %v1214
        %v1371 = vpop.f32.mrb[0].mxu0
        %v1372 = vadd.f32 %v1258, %v1371
        %v1373 = vpop.f32.mrb[0].mxu0
        %1374 = vmatprep.mubr.f32.mxu0 0.0
        %1375 = vmatmul.mubr.f32.gmra.mrb[0].mxu0 %v1215
        %v1376 = vpop.f32.mrb[0].mxu0
        %v1377 = vadd.f32 %v1258, %v1376
        %v1378 = vpop.f32.mrb[0].mxu0
        %1379 = vmatprep.mubr.f32.mxu0 0.0
        %1380 = vmatmul.mubr.f32.gmra.mrb[0].mxu0 %v1216
        %v1381 = vpop.f32.mrb[0].mxu0
        %v1382 = vadd.f32 %v1258, %v1381
        %v1383 = vpop.f32.mrb[0].mxu0
        %1384 = vmatprep.mubr.f32.mxu0 0.0
        %1385 = vmatmul.mubr.f32.gmra.mrb[0].mxu0 %v1217
        %v1386 = vpop.f32.mrb[0].mxu0
        %v1387 = vadd.f32 %v1258, %v1386
        %v1388 = vpop.f32.mrb[0].mxu0
        %1389 = vmatprep.mubr.f32.mxu0 0.0
        %1390 = vmatmul.mubr.f32.gmra.mrb[0].mxu0 %v1218
        %v1391 = vpop.f32.mrb[0].mxu0
        %v1392 = vadd.f32 %v1258, %v1391
        %v1393 = vpop.f32.mrb[0].mxu0
        %1394 = vmatprep.mubr.f32.mxu0 0.0
        %1395 = vmatmul.mubr.f32.gmra.mrb[0].mxu0 %v1219
        %v1396 = vpop.f32.mrb[0].mxu0
        %v1397 = vadd.f32 %v1258, %v1396
        %v1398 = vpop.f32.mrb[0].mxu0
        %1399 = vmatprep.mubr.f32.mxu0 0.0
        %1400 = vmatmul.mubr.f32.gmra.mrb[0].mxu0 %v1220
        %v1401 = vpop.f32.mrb[0].mxu0
        %v1402 = vadd.f32 %v1258, %v1401
        %v1403 = vpop.f32.mrb[0].mxu0
        %1404 = vmatprep.mubr.f32.mxu0 0.0
        %1405 = vmatmul.mubr.f32.gmra.mrb[0].mxu0 %v1221
        %v1406 = vpop.f32.mrb[0].mxu0
        %v1407 = vadd.f32 %v1258, %v1406
        %v1408 = vpop.f32.mrb[0].mxu0
        %1409 = vmatprep.mubr.f32.mxu0 0.0
        %1410 = vmatmul.mubr.f32.gmra.mrb[0].mxu0 %v1222
        %v1411 = vpop.f32.mrb[0].mxu0
        %v1412 = vadd.f32 %v1258, %v1411
        %v1413 = vpop.f32.mrb[0].mxu0
        %1414 = vmatprep.mubr.f32.mxu0 0.0
        %1415 = vmatmul.mubr.f32.gmra.mrb[0].mxu0 %v1223
        %v1416 = vpop.f32.mrb[0].mxu0
        %v1417 = vadd.f32 %v1258, %v1416
        %v1418 = vpop.f32.mrb[0].mxu0
        %1419 = vmatprep.mubr.f32.mxu0 0.0
        %1420 = vmatmul.mubr.f32.gmra.mrb[0].mxu0 %v1224
        %v1421 = vpop.f32.mrb[0].mxu0
        %v1422 = vadd.f32 %v1258, %v1421
        %v1423 = vpop.f32.mrb[0].mxu0
        %1424 = vmatprep.mubr.f32.mxu0 0.0
        %1425 = vmatmul.mubr.f32.gmra.mrb[0].mxu0 %v1225
        %v1426 = vpop.f32.mrb[0].mxu0
        %v1427 = vadd.f32 %v1258, %v1426
        %v1428 = vpop.f32.mrb[0].mxu0
        %1429 = vmatprep.mubr.f32.mxu0 0.0
        %1430 = vmatmul.mubr.f32.gmra.mrb[0].mxu0 %v1226
        %v1431 = vpop.f32.mrb[0].mxu0
        %v1432 = vadd.f32 %v1258, %v1431
        %v1433 = vpop.f32.mrb[0].mxu0
        %1434 = vmatprep.mubr.f32.mxu0 0.0
        %1435 = vmatmul.mubr.f32.gmra.mrb[0].mxu0 %v1227
        %v1436 = vpop.f32.mrb[0].mxu0
        %v1437 = vadd.f32 %v1258, %v1436
        %v1438 = vpop.f32.mrb[0].mxu0
        %1439 = vmatprep.mubr.f32.mxu0 0.0
        %1440 = vmatmul.mubr.f32.gmra.mrb[0].mxu0 %v1228
        %v1441 = vpop.f32.mrb[0].mxu0
        %v1442 = vadd.f32 %v1258, %v1441
        %v1443 = vpop.f32.mrb[0].mxu0
        %1444 = vmatprep.mubr.f32.mxu0 0.0
        %1445 = vmatmul.mubr.f32.gmra.mrb[0].mxu0 %v1229
        %v1446 = vpop.f32.mrb[0].mxu0
        %v1447 = vadd.f32 %v1258, %v1446
        %v1448 = vpop.f32.mrb[0].mxu0
        %1449 = vmatprep.mubr.f32.mxu0 0.0
        %1450 = vmatmul.mubr.f32.gmra.mrb[0].mxu0 %v1230
        %v1451 = vpop.f32.mrb[0].mxu0
        %v1452 = vadd.f32 %v1258, %v1451
        %v1453 = vpop.f32.mrb[0].mxu0
        %1454 = vmatprep.mubr.f32.mxu0 0.0
        %1455 = vmatmul.mubr.f32.gmra.mrb[0].mxu0 %v1231
        %v1456 = vpop.f32.mrb[0].mxu0
        %v1457 = vadd.f32 %v1258, %v1456
        %v1458 = vpop.f32.mrb[0].mxu0
        %1459 = vmatprep.mubr.f32.mxu0 0.0
        %1460 = vmatmul.mubr.f32.gmra.mrb[0].mxu0 %v1232
        %v1461 = vpop.f32.mrb[0].mxu0
        %v1462 = vadd.f32 %v1258, %v1461
        %v1463 = vpop.f32.mrb[0].mxu0
        %1464 = vmatprep.mubr.f32.mxu0 0.0
        %1465 = vmatmul.mubr.f32.gmra.mrb[0].mxu0 %v1233
        %v1466 = vpop.f32.mrb[0].mxu0
        %v1467 = vadd.f32 %v1258, %v1466
        %v1468 = vpop.f32.mrb[0].mxu0
        %1469 = vmatprep.mubr.f32.mxu0 0.0
        %1470 = vmatmul.mubr.f32.gmra.mrb[0].mxu0 %v1234
        %v1471 = vpop.f32.mrb[0].mxu0
        %v1472 = vadd.f32 %v1258, %v1471
        %v1473 = vpop.f32.mrb[0].mxu0
        %1474 = vmatprep.mubr.f32.mxu0 0.0
        %1475 = vmatmul.mubr.f32.gmra.mrb[0].mxu0 %v1235
        %v1476 = vpop.f32.mrb[0].mxu0
        %v1477 = vadd.f32 %v1258, %v1476
        %v1478 = vpop.f32.mrb[0].mxu0
        %1479 = vmatprep.mubr.f32.mxu0 0.0
        %1480 = vmatmul.mubr.f32.gmra.mrb[0].mxu0 %v1236
        %v1481 = vpop.f32.mrb[0].mxu0
        %v1482 = vadd.f32 %v1258, %v1481
        %v1483 = vpop.f32.mrb[0].mxu0
        %1484 = vdwg.mxu0
        %v1485 = vxor.u32 %v1327, 2147483648
        %v1486 = vxor.u32 %v1332, 2147483648
        %v1487 = vxor.u32 %v1337, 2147483648
        %v1488 = vxor.u32 %v1342, 2147483648
        %v1489 = vxor.u32 %v1347, 2147483648
        %v1490 = vxor.u32 %v1352, 2147483648
        %v1491 = vxor.u32 %v1357, 2147483648
        %v1492 = vxor.u32 %v1362, 2147483648
        %v1493 = vxor.u32 %v1367, 2147483648
        %v1494 = vxor.u32 %v1372, 2147483648
        %v1495 = vxor.u32 %v1377, 2147483648
        %v1496 = vxor.u32 %v1382, 2147483648
        %v1497 = vxor.u32 %v1387, 2147483648
        %v1498 = vxor.u32 %v1392, 2147483648
        %v1499 = vxor.u32 %v1397, 2147483648
        %v1500 = vxor.u32 %v1402, 2147483648
        %v1501 = vxor.u32 %v1407, 2147483648
        %v1502 = vxor.u32 %v1412, 2147483648
        %v1503 = vxor.u32 %v1417, 2147483648
        %v1504 = vxor.u32 %v1422, 2147483648
        %v1505 = vxor.u32 %v1427, 2147483648
        %v1506 = vxor.u32 %v1432, 2147483648
        %v1507 = vxor.u32 %v1437, 2147483648
        %v1508 = vxor.u32 %v1442, 2147483648
        %v1509 = vxor.u32 %v1447, 2147483648
        %v1510 = vxor.u32 %v1452, 2147483648
        %v1511 = vxor.u32 %v1457, 2147483648
        %v1512 = vxor.u32 %v1462, 2147483648
        %v1513 = vxor.u32 %v1467, 2147483648
        %v1514 = vxor.u32 %v1472, 2147483648
        %v1515 = vxor.u32 %v1477, 2147483648
        %v1516 = vxor.u32 %v1482, 2147483648
        %v1517 = vmul.f32 %v1485, 1.442695
        %v1518 = vpow.pop %v1517
        %v1519 = vmul.f32 %v1486, 1.442695
        %v1520 = vpow.pop %v1519
        %v1521 = vmul.f32 %v1487, 1.442695
        %v1522 = vpow.pop %v1521
        %v1523 = vmul.f32 %v1488, 1.442695
        %v1524 = vpow.pop %v1523
        %v1525 = vmul.f32 %v1489, 1.442695
        %v1526 = vpow.pop %v1525
        %v1527 = vmul.f32 %v1490, 1.442695
        %v1528 = vpow.pop %v1527
        %v1529 = vmul.f32 %v1491, 1.442695
        %v1530 = vpow.pop %v1529
        %v1531 = vmul.f32 %v1492, 1.442695
        %v1532 = vpow.pop %v1531
        %v1533 = vmul.f32 %v1493, 1.442695
        %v1534 = vpow.pop %v1533
        %v1535 = vmul.f32 %v1494, 1.442695
        %v1536 = vpow.pop %v1535
        %v1537 = vmul.f32 %v1495, 1.442695
        %v1538 = vpow.pop %v1537
        %v1539 = vmul.f32 %v1496, 1.442695
        %v1540 = vpow.pop %v1539
        %v1541 = vmul.f32 %v1497, 1.442695
        %v1542 = vpow.pop %v1541
        %v1543 = vmul.f32 %v1498, 1.442695
        %v1544 = vpow.pop %v1543
        %v1545 = vmul.f32 %v1499, 1.442695
        %v1546 = vpow.pop %v1545
        %v1547 = vmul.f32 %v1500, 1.442695
        %v1548 = vpow.pop %v1547
        %v1549 = vmul.f32 %v1501, 1.442695
        %v1550 = vpow.pop %v1549
        %v1551 = vmul.f32 %v1502, 1.442695
        %v1552 = vpow.pop %v1551
        %v1553 = vmul.f32 %v1503, 1.442695
        %v1554 = vpow.pop %v1553
        %v1555 = vmul.f32 %v1504, 1.442695
        %v1556 = vpow.pop %v1555
        %v1557 = vmul.f32 %v1505, 1.442695
        %v1558 = vpow.pop %v1557
        %v1559 = vmul.f32 %v1506, 1.442695
        %v1560 = vpow.pop %v1559
        %v1561 = vmul.f32 %v1507, 1.442695
        %v1562 = vpow.pop %v1561
        %v1563 = vmul.f32 %v1508, 1.442695
        %v1564 = vpow.pop %v1563
        %v1565 = vmul.f32 %v1509, 1.442695
        %v1566 = vpow.pop %v1565
        %v1567 = vmul.f32 %v1510, 1.442695
        %v1568 = vpow.pop %v1567
        %v1569 = vmul.f32 %v1511, 1.442695
        %v1570 = vpow.pop %v1569
        %v1571 = vmul.f32 %v1512, 1.442695
        %v1572 = vpow.pop %v1571
        %v1573 = vmul.f32 %v1513, 1.442695
        %v1574 = vpow.pop %v1573
        %v1575 = vmul.f32 %v1514, 1.442695
        %v1576 = vpow.pop %v1575
        %v1577 = vmul.f32 %v1515, 1.442695
        %v1578 = vpow.pop %v1577
        %v1579 = vmul.f32 %v1516, 1.442695
        %v1580 = vpow.pop %v1579
        %v1581 = vadd.f32 %v1518, 1.0
        %v1582 = vadd.f32 %v1520, 1.0
        %v1583 = vadd.f32 %v1522, 1.0
        %v1584 = vadd.f32 %v1524, 1.0
        %v1585 = vadd.f32 %v1526, 1.0
        %v1586 = vadd.f32 %v1528, 1.0
        %v1587 = vadd.f32 %v1530, 1.0
        %v1588 = vadd.f32 %v1532, 1.0
        %v1589 = vadd.f32 %v1534, 1.0
        %v1590 = vadd.f32 %v1536, 1.0
        %v1591 = vadd.f32 %v1538, 1.0
        %v1592 = vadd.f32 %v1540, 1.0
        %v1593 = vadd.f32 %v1542, 1.0
        %v1594 = vadd.f32 %v1544, 1.0
        %v1595 = vadd.f32 %v1546, 1.0
        %v1596 = vadd.f32 %v1548, 1.0
        %v1597 = vadd.f32 %v1550, 1.0
        %v1598 = vadd.f32 %v1552, 1.0
        %v1599 = vadd.f32 %v1554, 1.0
        %v1600 = vadd.f32 %v1556, 1.0
        %v1601 = vadd.f32 %v1558, 1.0
        %v1602 = vadd.f32 %v1560, 1.0
        %v1603 = vadd.f32 %v1562, 1.0
        %v1604 = vadd.f32 %v1564, 1.0
        %v1605 = vadd.f32 %v1566, 1.0
        %v1606 = vadd.f32 %v1568, 1.0
        %v1607 = vadd.f32 %v1570, 1.0
        %v1608 = vadd.f32 %v1572, 1.0
        %v1609 = vadd.f32 %v1574, 1.0
        %v1610 = vadd.f32 %v1576, 1.0
        %v1611 = vadd.f32 %v1578, 1.0
        %v1612 = vadd.f32 %v1580, 1.0
        %v1613 = vrcp.pop %v1581
        %v1614 = vmul.f32 1.0, %v1613
        %v1615 = vrcp.pop %v1582
        %v1616 = vmul.f32 1.0, %v1615
        %v1617 = vrcp.pop %v1583
        %v1618 = vmul.f32 1.0, %v1617
        %v1619 = vrcp.pop %v1584
        %v1620 = vmul.f32 1.0, %v1619
        %v1621 = vrcp.pop %v1585
        %v1622 = vmul.f32 1.0, %v1621
        %v1623 = vrcp.pop %v1586
        %v1624 = vmul.f32 1.0, %v1623
        %v1625 = vrcp.pop %v1587
        %v1626 = vmul.f32 1.0, %v1625
        %v1627 = vrcp.pop %v1588
        %v1628 = vmul.f32 1.0, %v1627
        %v1629 = vrcp.pop %v1589
        %v1630 = vmul.f32 1.0, %v1629
        %v1631 = vrcp.pop %v1590
        %v1632 = vmul.f32 1.0, %v1631
        %v1633 = vrcp.pop %v1591
        %v1634 = vmul.f32 1.0, %v1633
        %v1635 = vrcp.pop %v1592
        %v1636 = vmul.f32 1.0, %v1635
        %v1637 = vrcp.pop %v1593
        %v1638 = vmul.f32 1.0, %v1637
        %v1639 = vrcp.pop %v1594
        %v1640 = vmul.f32 1.0, %v1639
        %v1641 = vrcp.pop %v1595
        %v1642 = vmul.f32 1.0, %v1641
        %v1643 = vrcp.pop %v1596
        %v1644 = vmul.f32 1.0, %v1643
        %v1645 = vrcp.pop %v1597
        %v1646 = vmul.f32 1.0, %v1645
        %v1647 = vrcp.pop %v1598
        %v1648 = vmul.f32 1.0, %v1647
        %v1649 = vrcp.pop %v1599
        %v1650 = vmul.f32 1.0, %v1649
        %v1651 = vrcp.pop %v1600
        %v1652 = vmul.f32 1.0, %v1651
        %v1653 = vrcp.pop %v1601
        %v1654 = vmul.f32 1.0, %v1653
        %v1655 = vrcp.pop %v1602
        %v1656 = vmul.f32 1.0, %v1655
        %v1657 = vrcp.pop %v1603
        %v1658 = vmul.f32 1.0, %v1657
        %v1659 = vrcp.pop %v1604
        %v1660 = vmul.f32 1.0, %v1659
        %v1661 = vrcp.pop %v1605
        %v1662 = vmul.f32 1.0, %v1661
        %v1663 = vrcp.pop %v1606
        %v1664 = vmul.f32 1.0, %v1663
        %v1665 = vrcp.pop %v1607
        %v1666 = vmul.f32 1.0, %v1665
        %v1667 = vrcp.pop %v1608
        %v1668 = vmul.f32 1.0, %v1667
        %v1669 = vrcp.pop %v1609
        %v1670 = vmul.f32 1.0, %v1669
        %v1671 = vrcp.pop %v1610
        %v1672 = vmul.f32 1.0, %v1671
        %v1673 = vrcp.pop %v1611
        %v1674 = vmul.f32 1.0, %v1673
        %v1675 = vrcp.pop %v1612
        %v1676 = vmul.f32 1.0, %v1675
        %1677 = vst [vmem:[%s272] sm:$0xff] %v1614
        %1678 = vst [vmem:[%s272 + $0x8] sm:$0xff] %v1616
        %1679 = vst [vmem:[%s272 + $0x10] sm:$0xff] %v1618
        %1680 = vst [vmem:[%s272 + $0x18] sm:$0xff] %v1620
        %1681 = vst [vmem:[%s272 + $0x20] sm:$0xff] %v1622
        %1682 = vst [vmem:[%s272 + $0x28] sm:$0xff] %v1624
        %1683 = vst [vmem:[%s272 + $0x30] sm:$0xff] %v1626
        %1684 = vst [vmem:[%s272 + $0x38] sm:$0xff] %v1628
        %1685 = vst [vmem:[%s272 + $0x40] sm:$0xff] %v1630
        %1686 = vst [vmem:[%s272 + $0x48] sm:$0xff] %v1632
        %1687 = vst [vmem:[%s272 + $0x50] sm:$0xff] %v1634
        %1688 = vst [vmem:[%s272 + $0x58] sm:$0xff] %v1636
        %1689 = vst [vmem:[%s272 + $0x60] sm:$0xff] %v1638
        %1690 = vst [vmem:[%s272 + $0x68] sm:$0xff] %v1640
        %1691 = vst [vmem:[%s272 + $0x70] sm:$0xff] %v1642
        %1692 = vst [vmem:[%s272 + $0x78] sm:$0xff] %v1644
        %1693 = vst [vmem:[%s272 + $0x80] sm:$0xff] %v1646
        %1694 = vst [vmem:[%s272 + $0x88] sm:$0xff] %v1648
        %1695 = vst [vmem:[%s272 + $0x90] sm:$0xff] %v1650
        %1696 = vst [vmem:[%s272 + $0x98] sm:$0xff] %v1652
        %1697 = vst [vmem:[%s272 + $0xa0] sm:$0xff] %v1654
        %1698 = vst [vmem:[%s272 + $0xa8] sm:$0xff] %v1656
        %1699 = vst [vmem:[%s272 + $0xb0] sm:$0xff] %v1658
        %1700 = vst [vmem:[%s272 + $0xb8] sm:$0xff] %v1660
        %1701 = vst [vmem:[%s272 + $0xc0] sm:$0xff] %v1662
        %1702 = vst [vmem:[%s272 + $0xc8] sm:$0xff] %v1664
        %1703 = vst [vmem:[%s272 + $0xd0] sm:$0xff] %v1666
        %1704 = vst [vmem:[%s272 + $0xd8] sm:$0xff] %v1668
        %1705 = vst [vmem:[%s272 + $0xe0] sm:$0xff] %v1670
        %1706 = vst [vmem:[%s272 + $0xe8] sm:$0xff] %v1672
        %1707 = vst [vmem:[%s272 + $0xf0] sm:$0xff] %v1674
        %1708 = vst [vmem:[%s272 + $0xf8] sm:$0xff] %v1676
        %s1709 = sand.u32 %s181, 1
        %s1710 = scalar_lea.sflag [#allocation3], %s1709
        %s1711 = sand.u32 %s181, 1
        %s1712 = smul.addr %s1711, 256
        %s1713 = scalar_lea.vmem [#allocation2], %s1712
        // Predicated region
        $region49: #{tpu_custom_call.1} parent=47 // pred_check
          %p1714 = pneg %p191
        $region50: #{tpu_custom_call.1} parent=47 // pred_check_branch
          %1716 = sbr.rel (%p1714) target = $region52
        $region51: #{tpu_custom_call.1} parent=47 // pred_region
          %s1717 = smul.u32 32, %s21
          %s1719 = ssub.s32 4096, 4096
          %1720 = vsyncadd %s1710, %s1719
          %s1721 = smul.addr %s1717, 128
          %s1722 = scalar_lea.hbm %s7, %s1721
          %s1723 = sshll.u32 %s1713, 4
          %s1724 = int_to_ptr.vmem [resolvable:$true] %s1723
          %1729 = dma.vmem_to_hbm [thread:$0]  %s1724, 4096, %s1722, %s1710, 128, 128, 8
        $region52: #{tpu_custom_call.1} parent=47 // pred_fallthru
          _
      $region48: #{tpu_custom_call.1} parent=5 // pred_fallthru
        _
      %p1730 = scmp.le.s32.totalorder 2, %s16
      // Predicated region
      $region53: #{tpu_custom_call.1} parent=5 // pred_check
        %p1731 = pneg %p1730
      $region54: #{tpu_custom_call.1} parent=5 // pred_check_branch
        %1733 = sbr.rel (%p1731) target = $region56
      $region55: #{tpu_custom_call.1} parent=5 // pred_region
        %s1734 = ssub.s32 %s16, 2
        // Predicated region
        $region57: #{tpu_custom_call.1} parent=55 // pred_check
          %p1735 = pneg %p197
        $region58: #{tpu_custom_call.1} parent=55 // pred_check_branch
          %1737 = sbr.rel (%p1735) target = $region60
        $region59: #{tpu_custom_call.1} parent=55 // pred_region
          %s1738 = sand.u32 %s182, 1
          %s1739 = scalar_lea.sflag [#allocation3], %s1738
          %s1740 = sand.u32 %s182, 1
          %s1741 = smul.addr %s1740, 256
          %s1742 = scalar_lea.vmem [#allocation2], %s1741
          %1743 = dma.done %s1739, 4096
        $region60: #{tpu_custom_call.1} parent=55 // pred_fallthru
          _
      $region56: #{tpu_custom_call.1} parent=5 // pred_fallthru
        _
    $region6: #{tpu_custom_call.1} parent=1 // loop_footer
      %s20 = sadd.s32 1, %s16
    $region7: #{tpu_custom_call.1} parent=1 // loop_footer_branch
      %15 = sbr.rel target = $region3
    $region8: #{tpu_custom_call.1} parent=1 // loop_exit
      _
    %1744 = vsyncpa [#allocation3], 1
    %s1745 = scalar_lea.sflag [#allocation3], 1
    %1746 = vsyncpa %s1745, 1

</llo_original>
